<compile_context>
chip_gen: v7x
topology: tpu7x:2x2x1
jax: 0.10.0
libtpu: 0.0.40
codegen_flags: <defaults>
</compile_context>

<pallas_src>
import jax
import jax.numpy as jnp
from jax import lax
from jax.experimental import pallas as pl
from jax.experimental.pallas import tpu as pltpu

# ----------------------------- configuration -----------------------------
SEQ_LEN = 8          # n = len(seq)
EMBED_DIM = 32
HIDDEN_DIM = 32
VOCAB_SIZE = 50
TAGSET_SIZE = 8
NUM_LAYERS = 2
NUM_DIRS = 2                                  # is_bidirectional = True
FEAT_DIM = HIDDEN_DIM * NUM_DIRS              # 64, packed [fwd | bwd]
MAX_IN = max(EMBED_DIM, FEAT_DIM)             # 64 (padded contraction dim)
VOCAB_PAD = 64                                # vocab rows padded for one-hot matmul
TAG_PAD = 128                                 # lane-dense padded tag axis

# ---- single parameter slab: (SLAB_ROWS, 128) f32, 8-row-aligned bands -----
EMB_R0 = 0                                    # emb table: cols [0, MAX_IN)
WIH_R0 = EMB_R0 + VOCAB_PAD                   # 64:  layer l at rows +l*MAX_IN
WHH_R0 = WIH_R0 + NUM_LAYERS * MAX_IN         # 192: layer l block-diag at +l*FEAT_DIM
BIAS_R0 = WHH_R0 + NUM_LAYERS * FEAT_DIM      # 320: row 320+l = layer-l folded bias
FW_R0 = BIAS_R0 + 8                           # 328: fc1.weight^T (64, 128)
FB_R0 = FW_R0 + FEAT_DIM                      # 392: fc1.bias row (+ baked -1e30 mask)
SLAB_ROWS = FB_R0 + 8                         # 400


# ------------------------------- kernel ----------------------------------
def rnn_classifier_kernel(ids_ref, slab_ref, out_ref):
    """ids_ref: (n,) int32 in SMEM (scalar prefetch); slab_ref: (400,128) f32;
    out_ref: (n, 128) f32 log-probs (real tags in [:, :TAGSET_SIZE])."""
    H = HIDDEN_DIM

    # ---- embedding gather as a one-hot x table MXU matmul ----
    lane = lax.broadcasted_iota(jnp.int32, (1, VOCAB_PAD), 1)          # (1, 64)
    onehot = jnp.concatenate(
        [(lane == ids_ref[t]).astype(jnp.float32) for t in range(SEQ_LEN)],
        axis=0)                                                        # (8, 64)
    emb = slab_ref[pl.ds(EMB_R0, VOCAB_PAD), pl.ds(0, MAX_IN)]         # (64, 64)
    x = jnp.dot(onehot, emb, preferred_element_type=jnp.float32)       # (8, 64)

    # ---- stacked bidirectional RNN, direction-packed recurrence ----
    for l in range(NUM_LAYERS):
        wih = slab_ref[pl.ds(WIH_R0 + l * MAX_IN, MAX_IN), pl.ds(0, FEAT_DIM)]
        whh = slab_ref[pl.ds(WHH_R0 + l * FEAT_DIM, FEAT_DIM), pl.ds(0, FEAT_DIM)]
        bias = slab_ref[pl.ds(BIAS_R0 + l, 1), pl.ds(0, FEAT_DIM)]     # (1, 64)

        # batched input projections, all timesteps x both directions at once
        xp = jnp.dot(x, wih, preferred_element_type=jnp.float32) + bias  # (8, 64)
        # pack: row s = [xp_fwd(s) | xp_bwd(n-1-s)]   (off the serial chain)
        xp_b_rev = jnp.concatenate(
            [xp[SEQ_LEN - 1 - s:SEQ_LEN - s, H:] for s in range(SEQ_LEN)], axis=0)
        xp_packed = jnp.concatenate([xp[:, :H], xp_b_rev], axis=1)     # (8, 64)

        # serial recurrence: ONE (1,64)x(64,64) matvec + ONE tanh per step
        h = jnp.zeros((1, FEAT_DIM), jnp.float32)
        outs = [None] * SEQ_LEN
        for s in range(SEQ_LEN):                                       # static unroll
            h = jnp.tanh(xp_packed[s:s + 1, :] +
                         jnp.dot(h, whh, preferred_element_type=jnp.float32))
            outs[s] = h

        # unpack: layer output row t = [h_fwd(t) | h_bwd(t)]
        fwd = jnp.concatenate([outs[t][:, :H] for t in range(SEQ_LEN)], axis=0)
        bwd = jnp.concatenate([outs[SEQ_LEN - 1 - t][:, H:] for t in range(SEQ_LEN)],
                              axis=0)
        x = jnp.concatenate([fwd, bwd], axis=1)                        # (8, 64)

    # ---- fc1 + log_softmax (tag mask baked into fb: padded lanes = -1e30) ----
    fw = slab_ref[pl.ds(FW_R0, FEAT_DIM), :]                           # (64, 128)
    fb = slab_ref[pl.ds(FB_R0, 1), :]                                  # (1, 128)
    logits = jnp.dot(x, fw, preferred_element_type=jnp.float32) + fb   # (8, 128)
    m = jnp.max(logits, axis=-1, keepdims=True)
    z = logits - m
    lse = jnp.log(jnp.sum(jnp.exp(z), axis=-1, keepdims=True))
    out_ref[...] = z - lse


# ------------------------------- wrapper ----------------------------------
def rnn_classifier_forward(seq_ids, slab):
    """seq_ids: (n,) int32 token ids.  Returns (n, tagset) log-probs."""
    out_pad = pl.pallas_call(
        rnn_classifier_kernel,
        out_shape=jax.ShapeDtypeStruct((SEQ_LEN, TAG_PAD), jnp.float32),
        grid_spec=pltpu.PrefetchScalarGridSpec(
            num_scalar_prefetch=1,                    # seq ids -> SMEM
            grid=(1,),
            in_specs=[pl.BlockSpec((SLAB_ROWS, TAG_PAD), lambda i, ids: (0, 0))],
            out_specs=pl.BlockSpec((SEQ_LEN, TAG_PAD), lambda i, ids: (0, 0)),
        ),
        compiler_params=pltpu.CompilerParams(dimension_semantics=("arbitrary",)),
    )(seq_ids, slab)
    return out_pad[:, :TAGSET_SIZE]


# -------------------------- pure-JAX reference -----------------------------
def reference_forward(seq_ids, torch_params):
    """Faithful re-implementation of the PyTorch forward (eval mode)."""
    emb_table, rnn_params, (fc_w, fc_b) = torch_params
    x = emb_table[seq_ids]                                             # (n, E)
    for layer in range(NUM_LAYERS):
        outs = []
        for d in range(NUM_DIRS):
            w_ih, w_hh, b_ih, b_hh = rnn_params[layer][d]
            xp = x @ w_ih.T + b_ih + b_hh                              # (n, H)
            h = jnp.zeros((HIDDEN_DIM,), jnp.float32)
            res = [None] * SEQ_LEN
            steps = range(SEQ_LEN) if d == 0 else range(SEQ_LEN - 1, -1, -1)
            for t in steps:
                h = jnp.tanh(xp[t] + w_hh @ h)
                res[t] = h
            outs.append(jnp.stack(res, axis=0))
        x = jnp.concatenate(outs, axis=1)                              # (n, 2H)
    logits = x @ fc_w.T + fc_b                                         # (n, T)
    return jax.nn.log_softmax(logits, axis=1)


# ------------------------------ parameters ---------------------------------
def init_torch_style_params(key):
    keys = iter(jax.random.split(key, 4 + NUM_LAYERS * NUM_DIRS * 4))
    s = 0.1
    emb = s * jax.random.normal(next(keys), (VOCAB_SIZE, EMBED_DIM), jnp.float32)
    rnn = []
    for layer in range(NUM_LAYERS):
        in_dim = EMBED_DIM if layer == 0 else FEAT_DIM
        dirs = []
        for _ in range(NUM_DIRS):
            w_ih = s * jax.random.normal(next(keys), (HIDDEN_DIM, in_dim), jnp.float32)
            w_hh = s * jax.random.normal(next(keys), (HIDDEN_DIM, HIDDEN_DIM), jnp.float32)
            b_ih = s * jax.random.normal(next(keys), (HIDDEN_DIM,), jnp.float32)
            b_hh = s * jax.random.normal(next(keys), (HIDDEN_DIM,), jnp.float32)
            dirs.append((w_ih, w_hh, b_ih, b_hh))
        rnn.append(dirs)
    fc_w = s * jax.random.normal(next(keys), (TAGSET_SIZE, FEAT_DIM), jnp.float32)
    fc_b = s * jax.random.normal(next(keys), (TAGSET_SIZE,), jnp.float32)
    return emb, rnn, (fc_w, fc_b)


def pack_params(torch_params):
    """Pre-transpose / pad / fold PyTorch-layout params into one (400,128) slab."""
    emb, rnn, (fc_w, fc_b) = torch_params
    slab = jnp.zeros((SLAB_ROWS, TAG_PAD), jnp.float32)
    # embedding table (rows beyond vocab / cols beyond E stay zero)
    slab = slab.at[EMB_R0:EMB_R0 + VOCAB_SIZE, :EMBED_DIM].set(emb)
    for l in range(NUM_LAYERS):
        for d in range(NUM_DIRS):
            w_ih, w_hh, b_ih, b_hh = rnn[l][d]
            in_dim = w_ih.shape[1]
            r = WIH_R0 + l * MAX_IN                       # W_ih^T, dirs lane-concat
            slab = slab.at[r:r + in_dim,
                           d * HIDDEN_DIM:(d + 1) * HIDDEN_DIM].set(w_ih.T)
            r = WHH_R0 + l * FEAT_DIM + d * HIDDEN_DIM    # block-diag W_hh^T
            slab = slab.at[r:r + HIDDEN_DIM,
                           d * HIDDEN_DIM:(d + 1) * HIDDEN_DIM].set(w_hh.T)
            slab = slab.at[BIAS_R0 + l,                   # folded bias b_ih + b_hh
                           d * HIDDEN_DIM:(d + 1) * HIDDEN_DIM].set(b_ih + b_hh)
    # fc1 (weight^T zero-padded in lanes; bias row carries the baked tag mask)
    slab = slab.at[FW_R0:FW_R0 + FEAT_DIM, :TAGSET_SIZE].set(fc_w.T)
    slab = slab.at[FB_R0, :].set(jnp.full((TAG_PAD,), -1e30, jnp.float32))
    slab = slab.at[FB_R0, :TAGSET_SIZE].set(fc_b)
    return slab


# --------------------------------- main -------------------------------------
if __name__ == "__main__":
    root = jax.random.PRNGKey(0)
    kp, ks = jax.random.split(root)
    torch_params = init_torch_style_params(kp)
    slab = pack_params(torch_params)
    seq = jax.random.randint(ks, (SEQ_LEN,), 0, VOCAB_SIZE, dtype=jnp.int32)

    out = jax.block_until_ready(rnn_classifier_forward(seq, slab))
    assert out.shape == (SEQ_LEN, TAGSET_SIZE), out.shape

    ref = jax.block_until_ready(reference_forward(seq, torch_params))
    # Tolerance covers default-precision (bf16-pass) MXU rounding of f32 matmuls
    # in BOTH the kernel and the pure-JAX reference; typical diff is ~1e-3.
    assert jnp.allclose(out, ref, atol=1e-2, rtol=1e-2), \
        float(jnp.max(jnp.abs(out - ref)))

    print("KERNEL_OK")
</pallas_src>

<mosaic_0001>
module attributes {stable_mosaic.version = 11 : i64} {
  func.func @rnn_classifier_kernel(%arg0: i32, %arg1: memref<8xi32, #tpu.memory_space<smem>>, %arg2: memref<400x128xf32, #tpu.memory_space<vmem>>, %arg3: memref<8x128xf32, #tpu.memory_space<vmem>>) attributes {dimension_semantics = [#tpu.dimension_semantics<arbitrary>], iteration_bounds = array<i64: 1>, scalar_prefetch = 1 : i64, scratch_operands = 0 : i64, tpu.core_type = #tpu.core_type<tc>, window_params = [{pipeline_mode = #tpu.pipeline_mode<synchronous>, transform_indices = @transform_0, window_bounds = array<i64: 400, 128>}, {pipeline_mode = #tpu.pipeline_mode<synchronous>, transform_indices = @transform_1, window_bounds = array<i64: 8, 128>}]} {
    %0 = tpu.iota {dimensions = array<i32: 1>} : vector<1x64xi32>
    %c0 = arith.constant 0 : index
    %1 = memref.load %arg1[%c0] : memref<8xi32, #tpu.memory_space<smem>>
    %2 = vector.broadcast %1 : i32 to vector<1x64xi32>
    %3 = arith.cmpi eq, %0, %2 : vector<1x64xi32>
    %4 = arith.extui %3 : vector<1x64xi1> to vector<1x64xi32>
    %5 = arith.sitofp %4 : vector<1x64xi32> to vector<1x64xf32>
    %c1 = arith.constant 1 : index
    %6 = memref.load %arg1[%c1] : memref<8xi32, #tpu.memory_space<smem>>
    %7 = vector.broadcast %6 : i32 to vector<1x64xi32>
    %8 = arith.cmpi eq, %0, %7 : vector<1x64xi32>
    %9 = arith.extui %8 : vector<1x64xi1> to vector<1x64xi32>
    %10 = arith.sitofp %9 : vector<1x64xi32> to vector<1x64xf32>
    %c2 = arith.constant 2 : index
    %11 = memref.load %arg1[%c2] : memref<8xi32, #tpu.memory_space<smem>>
    %12 = vector.broadcast %11 : i32 to vector<1x64xi32>
    %13 = arith.cmpi eq, %0, %12 : vector<1x64xi32>
    %14 = arith.extui %13 : vector<1x64xi1> to vector<1x64xi32>
    %15 = arith.sitofp %14 : vector<1x64xi32> to vector<1x64xf32>
    %c3 = arith.constant 3 : index
    %16 = memref.load %arg1[%c3] : memref<8xi32, #tpu.memory_space<smem>>
    %17 = vector.broadcast %16 : i32 to vector<1x64xi32>
    %18 = arith.cmpi eq, %0, %17 : vector<1x64xi32>
    %19 = arith.extui %18 : vector<1x64xi1> to vector<1x64xi32>
    %20 = arith.sitofp %19 : vector<1x64xi32> to vector<1x64xf32>
    %c4 = arith.constant 4 : index
    %21 = memref.load %arg1[%c4] : memref<8xi32, #tpu.memory_space<smem>>
    %22 = vector.broadcast %21 : i32 to vector<1x64xi32>
    %23 = arith.cmpi eq, %0, %22 : vector<1x64xi32>
    %24 = arith.extui %23 : vector<1x64xi1> to vector<1x64xi32>
    %25 = arith.sitofp %24 : vector<1x64xi32> to vector<1x64xf32>
    %c5 = arith.constant 5 : index
    %26 = memref.load %arg1[%c5] : memref<8xi32, #tpu.memory_space<smem>>
    %27 = vector.broadcast %26 : i32 to vector<1x64xi32>
    %28 = arith.cmpi eq, %0, %27 : vector<1x64xi32>
    %29 = arith.extui %28 : vector<1x64xi1> to vector<1x64xi32>
    %30 = arith.sitofp %29 : vector<1x64xi32> to vector<1x64xf32>
    %c6 = arith.constant 6 : index
    %31 = memref.load %arg1[%c6] : memref<8xi32, #tpu.memory_space<smem>>
    %32 = vector.broadcast %31 : i32 to vector<1x64xi32>
    %33 = arith.cmpi eq, %0, %32 : vector<1x64xi32>
    %34 = arith.extui %33 : vector<1x64xi1> to vector<1x64xi32>
    %35 = arith.sitofp %34 : vector<1x64xi32> to vector<1x64xf32>
    %c7 = arith.constant 7 : index
    %36 = memref.load %arg1[%c7] : memref<8xi32, #tpu.memory_space<smem>>
    %37 = vector.broadcast %36 : i32 to vector<1x64xi32>
    %38 = arith.cmpi eq, %0, %37 : vector<1x64xi32>
    %39 = arith.extui %38 : vector<1x64xi1> to vector<1x64xi32>
    %40 = arith.sitofp %39 : vector<1x64xi32> to vector<1x64xf32>
    %41 = tpu.concatenate %5, %10, %15, %20, %25, %30, %35, %40 in 0 : vector<1x64xf32>, vector<1x64xf32>, vector<1x64xf32>, vector<1x64xf32>, vector<1x64xf32>, vector<1x64xf32>, vector<1x64xf32>, vector<1x64xf32> -> vector<8x64xf32>
    %c0_0 = arith.constant 0 : index
    %c0_1 = arith.constant 0 : index
    %42 = vector.load %arg2[%c0_0, %c0_1] : memref<400x128xf32, #tpu.memory_space<vmem>>, vector<64x64xf32>
    %cst = arith.constant dense<0.000000e+00> : vector<8x64xf32>
    %43 = tpu.matmul %41, %42, %cst {dimension_numbers = #tpu.dot_dimension_numbers<[1], [0], [0], [1], [0, 0, 1, 1], [], []>} : vector<8x64xf32>, vector<64x64xf32>, vector<8x64xf32> -> vector<8x64xf32>
    %c64 = arith.constant 64 : index
    %c0_2 = arith.constant 0 : index
    %44 = vector.load %arg2[%c64, %c0_2] : memref<400x128xf32, #tpu.memory_space<vmem>>, vector<64x64xf32>
    %c192 = arith.constant 192 : index
    %c0_3 = arith.constant 0 : index
    %45 = vector.load %arg2[%c192, %c0_3] : memref<400x128xf32, #tpu.memory_space<vmem>>, vector<64x64xf32>
    %c320 = arith.constant 320 : index
    %c0_4 = arith.constant 0 : index
    %46 = vector.load %arg2[%c320, %c0_4] : memref<400x128xf32, #tpu.memory_space<vmem>>, vector<1x64xf32>
    %cst_5 = arith.constant dense<0.000000e+00> : vector<8x64xf32>
    %47 = tpu.matmul %43, %44, %cst_5 {dimension_numbers = #tpu.dot_dimension_numbers<[1], [0], [0], [1], [0, 0, 1, 1], [], []>} : vector<8x64xf32>, vector<64x64xf32>, vector<8x64xf32> -> vector<8x64xf32>
    %48 = vector.broadcast %46 : vector<1x64xf32> to vector<8x64xf32>
    %49 = arith.addf %47, %48 : vector<8x64xf32>
    %50 = vector.extract_strided_slice %49 {offsets = [7, 32], sizes = [1, 32], strides = [1, 1]} : vector<8x64xf32> to vector<1x32xf32>
    %51 = vector.extract_strided_slice %49 {offsets = [6, 32], sizes = [1, 32], strides = [1, 1]} : vector<8x64xf32> to vector<1x32xf32>
    %52 = vector.extract_strided_slice %49 {offsets = [5, 32], sizes = [1, 32], strides = [1, 1]} : vector<8x64xf32> to vector<1x32xf32>
    %53 = vector.extract_strided_slice %49 {offsets = [4, 32], sizes = [1, 32], strides = [1, 1]} : vector<8x64xf32> to vector<1x32xf32>
    %54 = vector.extract_strided_slice %49 {offsets = [3, 32], sizes = [1, 32], strides = [1, 1]} : vector<8x64xf32> to vector<1x32xf32>
    %55 = vector.extract_strided_slice %49 {offsets = [2, 32], sizes = [1, 32], strides = [1, 1]} : vector<8x64xf32> to vector<1x32xf32>
    %56 = vector.extract_strided_slice %49 {offsets = [1, 32], sizes = [1, 32], strides = [1, 1]} : vector<8x64xf32> to vector<1x32xf32>
    %57 = vector.extract_strided_slice %49 {offsets = [0, 32], sizes = [1, 32], strides = [1, 1]} : vector<8x64xf32> to vector<1x32xf32>
    %58 = tpu.concatenate %50, %51, %52, %53, %54, %55, %56, %57 in 0 : vector<1x32xf32>, vector<1x32xf32>, vector<1x32xf32>, vector<1x32xf32>, vector<1x32xf32>, vector<1x32xf32>, vector<1x32xf32>, vector<1x32xf32> -> vector<8x32xf32>
    %59 = vector.extract_strided_slice %49 {offsets = [0, 0], sizes = [8, 32], strides = [1, 1]} : vector<8x64xf32> to vector<8x32xf32>
    %60 = tpu.concatenate %59, %58 in 1 : vector<8x32xf32>, vector<8x32xf32> -> vector<8x64xf32>
    %cst_6 = arith.constant 0.000000e+00 : f32
    %61 = vector.broadcast %cst_6 : f32 to vector<1x64xf32>
    %62 = vector.extract_strided_slice %60 {offsets = [0, 0], sizes = [1, 64], strides = [1, 1]} : vector<8x64xf32> to vector<1x64xf32>
    %cst_7 = arith.constant dense<0.000000e+00> : vector<1x64xf32>
    %63 = tpu.matmul %61, %45, %cst_7 {dimension_numbers = #tpu.dot_dimension_numbers<[1], [0], [0], [1], [0, 0, 1, 1], [], []>} : vector<1x64xf32>, vector<64x64xf32>, vector<1x64xf32> -> vector<1x64xf32>
    %64 = arith.addf %62, %63 : vector<1x64xf32>
    %65 = math.tanh %64 : vector<1x64xf32>
    %66 = vector.extract_strided_slice %60 {offsets = [1, 0], sizes = [1, 64], strides = [1, 1]} : vector<8x64xf32> to vector<1x64xf32>
    %cst_8 = arith.constant dense<0.000000e+00> : vector<1x64xf32>
    %67 = tpu.matmul %65, %45, %cst_8 {dimension_numbers = #tpu.dot_dimension_numbers<[1], [0], [0], [1], [0, 0, 1, 1], [], []>} : vector<1x64xf32>, vector<64x64xf32>, vector<1x64xf32> -> vector<1x64xf32>
    %68 = arith.addf %66, %67 : vector<1x64xf32>
    %69 = math.tanh %68 : vector<1x64xf32>
    %70 = vector.extract_strided_slice %60 {offsets = [2, 0], sizes = [1, 64], strides = [1, 1]} : vector<8x64xf32> to vector<1x64xf32>
    %cst_9 = arith.constant dense<0.000000e+00> : vector<1x64xf32>
    %71 = tpu.matmul %69, %45, %cst_9 {dimension_numbers = #tpu.dot_dimension_numbers<[1], [0], [0], [1], [0, 0, 1, 1], [], []>} : vector<1x64xf32>, vector<64x64xf32>, vector<1x64xf32> -> vector<1x64xf32>
    %72 = arith.addf %70, %71 : vector<1x64xf32>
    %73 = math.tanh %72 : vector<1x64xf32>
    %74 = vector.extract_strided_slice %60 {offsets = [3, 0], sizes = [1, 64], strides = [1, 1]} : vector<8x64xf32> to vector<1x64xf32>
    %cst_10 = arith.constant dense<0.000000e+00> : vector<1x64xf32>
    %75 = tpu.matmul %73, %45, %cst_10 {dimension_numbers = #tpu.dot_dimension_numbers<[1], [0], [0], [1], [0, 0, 1, 1], [], []>} : vector<1x64xf32>, vector<64x64xf32>, vector<1x64xf32> -> vector<1x64xf32>
    %76 = arith.addf %74, %75 : vector<1x64xf32>
    %77 = math.tanh %76 : vector<1x64xf32>
    %78 = vector.extract_strided_slice %60 {offsets = [4, 0], sizes = [1, 64], strides = [1, 1]} : vector<8x64xf32> to vector<1x64xf32>
    %cst_11 = arith.constant dense<0.000000e+00> : vector<1x64xf32>
    %79 = tpu.matmul %77, %45, %cst_11 {dimension_numbers = #tpu.dot_dimension_numbers<[1], [0], [0], [1], [0, 0, 1, 1], [], []>} : vector<1x64xf32>, vector<64x64xf32>, vector<1x64xf32> -> vector<1x64xf32>
    %80 = arith.addf %78, %79 : vector<1x64xf32>
    %81 = math.tanh %80 : vector<1x64xf32>
    %82 = vector.extract_strided_slice %60 {offsets = [5, 0], sizes = [1, 64], strides = [1, 1]} : vector<8x64xf32> to vector<1x64xf32>
    %cst_12 = arith.constant dense<0.000000e+00> : vector<1x64xf32>
    %83 = tpu.matmul %81, %45, %cst_12 {dimension_numbers = #tpu.dot_dimension_numbers<[1], [0], [0], [1], [0, 0, 1, 1], [], []>} : vector<1x64xf32>, vector<64x64xf32>, vector<1x64xf32> -> vector<1x64xf32>
    %84 = arith.addf %82, %83 : vector<1x64xf32>
    %85 = math.tanh %84 : vector<1x64xf32>
    %86 = vector.extract_strided_slice %60 {offsets = [6, 0], sizes = [1, 64], strides = [1, 1]} : vector<8x64xf32> to vector<1x64xf32>
    %cst_13 = arith.constant dense<0.000000e+00> : vector<1x64xf32>
    %87 = tpu.matmul %85, %45, %cst_13 {dimension_numbers = #tpu.dot_dimension_numbers<[1], [0], [0], [1], [0, 0, 1, 1], [], []>} : vector<1x64xf32>, vector<64x64xf32>, vector<1x64xf32> -> vector<1x64xf32>
    %88 = arith.addf %86, %87 : vector<1x64xf32>
    %89 = math.tanh %88 : vector<1x64xf32>
    %90 = vector.extract_strided_slice %60 {offsets = [7, 0], sizes = [1, 64], strides = [1, 1]} : vector<8x64xf32> to vector<1x64xf32>
    %cst_14 = arith.constant dense<0.000000e+00> : vector<1x64xf32>
    %91 = tpu.matmul %89, %45, %cst_14 {dimension_numbers = #tpu.dot_dimension_numbers<[1], [0], [0], [1], [0, 0, 1, 1], [], []>} : vector<1x64xf32>, vector<64x64xf32>, vector<1x64xf32> -> vector<1x64xf32>
    %92 = arith.addf %90, %91 : vector<1x64xf32>
    %93 = math.tanh %92 : vector<1x64xf32>
    %94 = vector.extract_strided_slice %65 {offsets = [0, 0], sizes = [1, 32], strides = [1, 1]} : vector<1x64xf32> to vector<1x32xf32>
    %95 = vector.extract_strided_slice %69 {offsets = [0, 0], sizes = [1, 32], strides = [1, 1]} : vector<1x64xf32> to vector<1x32xf32>
    %96 = vector.extract_strided_slice %73 {offsets = [0, 0], sizes = [1, 32], strides = [1, 1]} : vector<1x64xf32> to vector<1x32xf32>
    %97 = vector.extract_strided_slice %77 {offsets = [0, 0], sizes = [1, 32], strides = [1, 1]} : vector<1x64xf32> to vector<1x32xf32>
    %98 = vector.extract_strided_slice %81 {offsets = [0, 0], sizes = [1, 32], strides = [1, 1]} : vector<1x64xf32> to vector<1x32xf32>
    %99 = vector.extract_strided_slice %85 {offsets = [0, 0], sizes = [1, 32], strides = [1, 1]} : vector<1x64xf32> to vector<1x32xf32>
    %100 = vector.extract_strided_slice %89 {offsets = [0, 0], sizes = [1, 32], strides = [1, 1]} : vector<1x64xf32> to vector<1x32xf32>
    %101 = vector.extract_strided_slice %93 {offsets = [0, 0], sizes = [1, 32], strides = [1, 1]} : vector<1x64xf32> to vector<1x32xf32>
    %102 = tpu.concatenate %94, %95, %96, %97, %98, %99, %100, %101 in 0 : vector<1x32xf32>, vector<1x32xf32>, vector<1x32xf32>, vector<1x32xf32>, vector<1x32xf32>, vector<1x32xf32>, vector<1x32xf32>, vector<1x32xf32> -> vector<8x32xf32>
    %103 = vector.extract_strided_slice %93 {offsets = [0, 32], sizes = [1, 32], strides = [1, 1]} : vector<1x64xf32> to vector<1x32xf32>
    %104 = vector.extract_strided_slice %89 {offsets = [0, 32], sizes = [1, 32], strides = [1, 1]} : vector<1x64xf32> to vector<1x32xf32>
    %105 = vector.extract_strided_slice %85 {offsets = [0, 32], sizes = [1, 32], strides = [1, 1]} : vector<1x64xf32> to vector<1x32xf32>
    %106 = vector.extract_strided_slice %81 {offsets = [0, 32], sizes = [1, 32], strides = [1, 1]} : vector<1x64xf32> to vector<1x32xf32>
    %107 = vector.extract_strided_slice %77 {offsets = [0, 32], sizes = [1, 32], strides = [1, 1]} : vector<1x64xf32> to vector<1x32xf32>
    %108 = vector.extract_strided_slice %73 {offsets = [0, 32], sizes = [1, 32], strides = [1, 1]} : vector<1x64xf32> to vector<1x32xf32>
    %109 = vector.extract_strided_slice %69 {offsets = [0, 32], sizes = [1, 32], strides = [1, 1]} : vector<1x64xf32> to vector<1x32xf32>
    %110 = vector.extract_strided_slice %65 {offsets = [0, 32], sizes = [1, 32], strides = [1, 1]} : vector<1x64xf32> to vector<1x32xf32>
    %111 = tpu.concatenate %103, %104, %105, %106, %107, %108, %109, %110 in 0 : vector<1x32xf32>, vector<1x32xf32>, vector<1x32xf32>, vector<1x32xf32>, vector<1x32xf32>, vector<1x32xf32>, vector<1x32xf32>, vector<1x32xf32> -> vector<8x32xf32>
    %112 = tpu.concatenate %102, %111 in 1 : vector<8x32xf32>, vector<8x32xf32> -> vector<8x64xf32>
    %c128 = arith.constant 128 : index
    %c0_15 = arith.constant 0 : index
    %113 = vector.load %arg2[%c128, %c0_15] : memref<400x128xf32, #tpu.memory_space<vmem>>, vector<64x64xf32>
    %c256 = arith.constant 256 : index
    %c0_16 = arith.constant 0 : index
    %114 = vector.load %arg2[%c256, %c0_16] : memref<400x128xf32, #tpu.memory_space<vmem>>, vector<64x64xf32>
    %c321 = arith.constant 321 : index
    %c0_17 = arith.constant 0 : index
    %115 = vector.load %arg2[%c321, %c0_17] : memref<400x128xf32, #tpu.memory_space<vmem>>, vector<1x64xf32>
    %cst_18 = arith.constant dense<0.000000e+00> : vector<8x64xf32>
    %116 = tpu.matmul %112, %113, %cst_18 {dimension_numbers = #tpu.dot_dimension_numbers<[1], [0], [0], [1], [0, 0, 1, 1], [], []>} : vector<8x64xf32>, vector<64x64xf32>, vector<8x64xf32> -> vector<8x64xf32>
    %117 = vector.broadcast %115 : vector<1x64xf32> to vector<8x64xf32>
    %118 = arith.addf %116, %117 : vector<8x64xf32>
    %119 = vector.extract_strided_slice %118 {offsets = [7, 32], sizes = [1, 32], strides = [1, 1]} : vector<8x64xf32> to vector<1x32xf32>
    %120 = vector.extract_strided_slice %118 {offsets = [6, 32], sizes = [1, 32], strides = [1, 1]} : vector<8x64xf32> to vector<1x32xf32>
    %121 = vector.extract_strided_slice %118 {offsets = [5, 32], sizes = [1, 32], strides = [1, 1]} : vector<8x64xf32> to vector<1x32xf32>
    %122 = vector.extract_strided_slice %118 {offsets = [4, 32], sizes = [1, 32], strides = [1, 1]} : vector<8x64xf32> to vector<1x32xf32>
    %123 = vector.extract_strided_slice %118 {offsets = [3, 32], sizes = [1, 32], strides = [1, 1]} : vector<8x64xf32> to vector<1x32xf32>
    %124 = vector.extract_strided_slice %118 {offsets = [2, 32], sizes = [1, 32], strides = [1, 1]} : vector<8x64xf32> to vector<1x32xf32>
    %125 = vector.extract_strided_slice %118 {offsets = [1, 32], sizes = [1, 32], strides = [1, 1]} : vector<8x64xf32> to vector<1x32xf32>
    %126 = vector.extract_strided_slice %118 {offsets = [0, 32], sizes = [1, 32], strides = [1, 1]} : vector<8x64xf32> to vector<1x32xf32>
    %127 = tpu.concatenate %119, %120, %121, %122, %123, %124, %125, %126 in 0 : vector<1x32xf32>, vector<1x32xf32>, vector<1x32xf32>, vector<1x32xf32>, vector<1x32xf32>, vector<1x32xf32>, vector<1x32xf32>, vector<1x32xf32> -> vector<8x32xf32>
    %128 = vector.extract_strided_slice %118 {offsets = [0, 0], sizes = [8, 32], strides = [1, 1]} : vector<8x64xf32> to vector<8x32xf32>
    %129 = tpu.concatenate %128, %127 in 1 : vector<8x32xf32>, vector<8x32xf32> -> vector<8x64xf32>
    %cst_19 = arith.constant 0.000000e+00 : f32
    %130 = vector.broadcast %cst_19 : f32 to vector<1x64xf32>
    %131 = vector.extract_strided_slice %129 {offsets = [0, 0], sizes = [1, 64], strides = [1, 1]} : vector<8x64xf32> to vector<1x64xf32>
    %cst_20 = arith.constant dense<0.000000e+00> : vector<1x64xf32>
    %132 = tpu.matmul %130, %114, %cst_20 {dimension_numbers = #tpu.dot_dimension_numbers<[1], [0], [0], [1], [0, 0, 1, 1], [], []>} : vector<1x64xf32>, vector<64x64xf32>, vector<1x64xf32> -> vector<1x64xf32>
    %133 = arith.addf %131, %132 : vector<1x64xf32>
    %134 = math.tanh %133 : vector<1x64xf32>
    %135 = vector.extract_strided_slice %129 {offsets = [1, 0], sizes = [1, 64], strides = [1, 1]} : vector<8x64xf32> to vector<1x64xf32>
    %cst_21 = arith.constant dense<0.000000e+00> : vector<1x64xf32>
    %136 = tpu.matmul %134, %114, %cst_21 {dimension_numbers = #tpu.dot_dimension_numbers<[1], [0], [0], [1], [0, 0, 1, 1], [], []>} : vector<1x64xf32>, vector<64x64xf32>, vector<1x64xf32> -> vector<1x64xf32>
    %137 = arith.addf %135, %136 : vector<1x64xf32>
    %138 = math.tanh %137 : vector<1x64xf32>
    %139 = vector.extract_strided_slice %129 {offsets = [2, 0], sizes = [1, 64], strides = [1, 1]} : vector<8x64xf32> to vector<1x64xf32>
    %cst_22 = arith.constant dense<0.000000e+00> : vector<1x64xf32>
    %140 = tpu.matmul %138, %114, %cst_22 {dimension_numbers = #tpu.dot_dimension_numbers<[1], [0], [0], [1], [0, 0, 1, 1], [], []>} : vector<1x64xf32>, vector<64x64xf32>, vector<1x64xf32> -> vector<1x64xf32>
    %141 = arith.addf %139, %140 : vector<1x64xf32>
    %142 = math.tanh %141 : vector<1x64xf32>
    %143 = vector.extract_strided_slice %129 {offsets = [3, 0], sizes = [1, 64], strides = [1, 1]} : vector<8x64xf32> to vector<1x64xf32>
    %cst_23 = arith.constant dense<0.000000e+00> : vector<1x64xf32>
    %144 = tpu.matmul %142, %114, %cst_23 {dimension_numbers = #tpu.dot_dimension_numbers<[1], [0], [0], [1], [0, 0, 1, 1], [], []>} : vector<1x64xf32>, vector<64x64xf32>, vector<1x64xf32> -> vector<1x64xf32>
    %145 = arith.addf %143, %144 : vector<1x64xf32>
    %146 = math.tanh %145 : vector<1x64xf32>
    %147 = vector.extract_strided_slice %129 {offsets = [4, 0], sizes = [1, 64], strides = [1, 1]} : vector<8x64xf32> to vector<1x64xf32>
    %cst_24 = arith.constant dense<0.000000e+00> : vector<1x64xf32>
    %148 = tpu.matmul %146, %114, %cst_24 {dimension_numbers = #tpu.dot_dimension_numbers<[1], [0], [0], [1], [0, 0, 1, 1], [], []>} : vector<1x64xf32>, vector<64x64xf32>, vector<1x64xf32> -> vector<1x64xf32>
    %149 = arith.addf %147, %148 : vector<1x64xf32>
    %150 = math.tanh %149 : vector<1x64xf32>
    %151 = vector.extract_strided_slice %129 {offsets = [5, 0], sizes = [1, 64], strides = [1, 1]} : vector<8x64xf32> to vector<1x64xf32>
    %cst_25 = arith.constant dense<0.000000e+00> : vector<1x64xf32>
    %152 = tpu.matmul %150, %114, %cst_25 {dimension_numbers = #tpu.dot_dimension_numbers<[1], [0], [0], [1], [0, 0, 1, 1], [], []>} : vector<1x64xf32>, vector<64x64xf32>, vector<1x64xf32> -> vector<1x64xf32>
    %153 = arith.addf %151, %152 : vector<1x64xf32>
    %154 = math.tanh %153 : vector<1x64xf32>
    %155 = vector.extract_strided_slice %129 {offsets = [6, 0], sizes = [1, 64], strides = [1, 1]} : vector<8x64xf32> to vector<1x64xf32>
    %cst_26 = arith.constant dense<0.000000e+00> : vector<1x64xf32>
    %156 = tpu.matmul %154, %114, %cst_26 {dimension_numbers = #tpu.dot_dimension_numbers<[1], [0], [0], [1], [0, 0, 1, 1], [], []>} : vector<1x64xf32>, vector<64x64xf32>, vector<1x64xf32> -> vector<1x64xf32>
    %157 = arith.addf %155, %156 : vector<1x64xf32>
    %158 = math.tanh %157 : vector<1x64xf32>
    %159 = vector.extract_strided_slice %129 {offsets = [7, 0], sizes = [1, 64], strides = [1, 1]} : vector<8x64xf32> to vector<1x64xf32>
    %cst_27 = arith.constant dense<0.000000e+00> : vector<1x64xf32>
    %160 = tpu.matmul %158, %114, %cst_27 {dimension_numbers = #tpu.dot_dimension_numbers<[1], [0], [0], [1], [0, 0, 1, 1], [], []>} : vector<1x64xf32>, vector<64x64xf32>, vector<1x64xf32> -> vector<1x64xf32>
    %161 = arith.addf %159, %160 : vector<1x64xf32>
    %162 = math.tanh %161 : vector<1x64xf32>
    %163 = vector.extract_strided_slice %134 {offsets = [0, 0], sizes = [1, 32], strides = [1, 1]} : vector<1x64xf32> to vector<1x32xf32>
    %164 = vector.extract_strided_slice %138 {offsets = [0, 0], sizes = [1, 32], strides = [1, 1]} : vector<1x64xf32> to vector<1x32xf32>
    %165 = vector.extract_strided_slice %142 {offsets = [0, 0], sizes = [1, 32], strides = [1, 1]} : vector<1x64xf32> to vector<1x32xf32>
    %166 = vector.extract_strided_slice %146 {offsets = [0, 0], sizes = [1, 32], strides = [1, 1]} : vector<1x64xf32> to vector<1x32xf32>
    %167 = vector.extract_strided_slice %150 {offsets = [0, 0], sizes = [1, 32], strides = [1, 1]} : vector<1x64xf32> to vector<1x32xf32>
    %168 = vector.extract_strided_slice %154 {offsets = [0, 0], sizes = [1, 32], strides = [1, 1]} : vector<1x64xf32> to vector<1x32xf32>
    %169 = vector.extract_strided_slice %158 {offsets = [0, 0], sizes = [1, 32], strides = [1, 1]} : vector<1x64xf32> to vector<1x32xf32>
    %170 = vector.extract_strided_slice %162 {offsets = [0, 0], sizes = [1, 32], strides = [1, 1]} : vector<1x64xf32> to vector<1x32xf32>
    %171 = tpu.concatenate %163, %164, %165, %166, %167, %168, %169, %170 in 0 : vector<1x32xf32>, vector<1x32xf32>, vector<1x32xf32>, vector<1x32xf32>, vector<1x32xf32>, vector<1x32xf32>, vector<1x32xf32>, vector<1x32xf32> -> vector<8x32xf32>
    %172 = vector.extract_strided_slice %162 {offsets = [0, 32], sizes = [1, 32], strides = [1, 1]} : vector<1x64xf32> to vector<1x32xf32>
    %173 = vector.extract_strided_slice %158 {offsets = [0, 32], sizes = [1, 32], strides = [1, 1]} : vector<1x64xf32> to vector<1x32xf32>
    %174 = vector.extract_strided_slice %154 {offsets = [0, 32], sizes = [1, 32], strides = [1, 1]} : vector<1x64xf32> to vector<1x32xf32>
    %175 = vector.extract_strided_slice %150 {offsets = [0, 32], sizes = [1, 32], strides = [1, 1]} : vector<1x64xf32> to vector<1x32xf32>
    %176 = vector.extract_strided_slice %146 {offsets = [0, 32], sizes = [1, 32], strides = [1, 1]} : vector<1x64xf32> to vector<1x32xf32>
    %177 = vector.extract_strided_slice %142 {offsets = [0, 32], sizes = [1, 32], strides = [1, 1]} : vector<1x64xf32> to vector<1x32xf32>
    %178 = vector.extract_strided_slice %138 {offsets = [0, 32], sizes = [1, 32], strides = [1, 1]} : vector<1x64xf32> to vector<1x32xf32>
    %179 = vector.extract_strided_slice %134 {offsets = [0, 32], sizes = [1, 32], strides = [1, 1]} : vector<1x64xf32> to vector<1x32xf32>
    %180 = tpu.concatenate %172, %173, %174, %175, %176, %177, %178, %179 in 0 : vector<1x32xf32>, vector<1x32xf32>, vector<1x32xf32>, vector<1x32xf32>, vector<1x32xf32>, vector<1x32xf32>, vector<1x32xf32>, vector<1x32xf32> -> vector<8x32xf32>
    %181 = tpu.concatenate %171, %180 in 1 : vector<8x32xf32>, vector<8x32xf32> -> vector<8x64xf32>
    %c328 = arith.constant 328 : index
    %c0_28 = arith.constant 0 : index
    %182 = vector.load %arg2[%c328, %c0_28] : memref<400x128xf32, #tpu.memory_space<vmem>>, vector<64x128xf32>
    %c392 = arith.constant 392 : index
    %c0_29 = arith.constant 0 : index
    %183 = vector.load %arg2[%c392, %c0_29] : memref<400x128xf32, #tpu.memory_space<vmem>>, vector<1x128xf32>
    %cst_30 = arith.constant dense<0.000000e+00> : vector<8x128xf32>
    %184 = tpu.matmul %181, %182, %cst_30 {dimension_numbers = #tpu.dot_dimension_numbers<[1], [0], [0], [1], [0, 0, 1, 1], [], []>} : vector<8x64xf32>, vector<64x128xf32>, vector<8x128xf32> -> vector<8x128xf32>
    %185 = vector.broadcast %183 : vector<1x128xf32> to vector<8x128xf32>
    %186 = arith.addf %184, %185 : vector<8x128xf32>
    %cst_31 = arith.constant dense<0xFF800000> : vector<8xf32>
    %187 = vector.multi_reduction <maximumf>, %186, %cst_31 [1] : vector<8x128xf32> to vector<8xf32>
    %188 = vector.shape_cast %187 : vector<8xf32> to vector<8x1xf32>
    %189 = vector.broadcast %188 : vector<8x1xf32> to vector<8x128xf32>
    %190 = arith.subf %186, %189 : vector<8x128xf32>
    %191 = math.exp %190 : vector<8x128xf32>
    %cst_32 = arith.constant dense<0.000000e+00> : vector<8xf32>
    %192 = vector.multi_reduction <add>, %191, %cst_32 [1] : vector<8x128xf32> to vector<8xf32>
    %193 = vector.shape_cast %192 : vector<8xf32> to vector<8x1xf32>
    %194 = math.log %193 : vector<8x1xf32>
    %195 = vector.broadcast %194 : vector<8x1xf32> to vector<8x128xf32>
    %196 = arith.subf %190, %195 : vector<8x128xf32>
    %c0_33 = arith.constant 0 : index
    %c0_34 = arith.constant 0 : index
    %197 = vector.load %arg3[%c0_33, %c0_34] : memref<8x128xf32, #tpu.memory_space<vmem>>, vector<8x128xf32>
    tpu.vector_store %arg3[%c0_33, %c0_34], %196 {strides = array<i32>} : memref<8x128xf32, #tpu.memory_space<vmem>>, vector<8x128xf32>,
    return
  }
  func.func @transform_0(%arg0: i32, %arg1: memref<8xi32, #tpu.memory_space<smem>>) -> (i32, i32) {
    %c0_i32 = arith.constant 0 : i32
    %c0_i32_0 = arith.constant 0 : i32
    %c0_i32_1 = arith.constant 0 : i32
    return %c0_i32, %c0_i32_0 : i32, i32
  }
  func.func @transform_1(%arg0: i32, %arg1: memref<8xi32, #tpu.memory_space<smem>>) -> (i32, i32) {
    %c0_i32 = arith.constant 0 : i32
    %c0_i32_0 = arith.constant 0 : i32
    %c0_i32_1 = arith.constant 0 : i32
    return %c0_i32, %c0_i32_0 : i32, i32
  }
}

</mosaic_0001>

<llo_original>
// kernel: tpu_custom_call.1
$region0: #{tpu_custom_call.1}
  #allocation0 [shape = 'u32[]', space=smem, size = 0x4, offset = 0x4, fixed_abs, tag = 'smem constant byte address 0x4 - core index']
  #allocation1 [shape = 'u32[144,128]{1,0:T(1,128)}', space=vmem, size = 0x12000, scoped, tag = 'internal scratch']
  #allocation2 [shape = 's32[1]{0}', space=sflag, size = 0x4, scoped, tag = 'scoped memory for tpu_custom_call.1']
  #allocation3 [shape = 'u8[512]{0}', space=smem, size = 0x200, scoped, tag = 'prefetched SMEM operand 0']
  %s0 = inlined_call_operand.hbm [shape: s32[8], index: 0, kind: input, shape index: {}]
  %s1 = inlined_call_operand.hbm [shape: f32[400,128], index: 1, kind: input, shape index: {}]
  %s2 = inlined_call_operand.hbm [shape: f32[8,128], index: 2, kind: output, shape index: {}]
  %s3 = sld [smem:[#allocation0]]
  $region18: #{tpu_custom_call.1} parent=0
    _
  %s5 = ssub.s32 1, %s3
  %s6 = scalar_select 0, %s5, %s3
  %8 = dma.hbm_to_smem %s0, 16, [#allocation3], [#allocation2]
  %9 = dma.done [#allocation2], 16
  %10 = sfence
  $region1: #{tpu_custom_call.1} parent=0
    #allocation4 [shape = 'u8[204800]{0}', space=vmem, size = 0x32000, scoped, tag = 'input window, operand 1, single buffered']
    #allocation5 [shape = 's32[1]{0}', space=sflag, size = 0x4, scoped, tag = 'scoped memory for tpu_custom_call.1']
    #allocation6 [shape = 's32[1]{0}', space=sflag, size = 0x4, scoped, tag = 'scoped memory for tpu_custom_call.1']
    #allocation7 [shape = 'u8[4096]{0}', space=vmem, size = 0x1000, scoped, tag = 'output window, operand 0, single buffered']
    %11 = vsyncpa [#allocation5], 0
    %12 = vsyncpa [#allocation6], 0
    // Predicated region
    $region2: #{tpu_custom_call.1} parent=1 // pred_check
      _
    $region3: #{tpu_custom_call.1} parent=1 // pred_check_branch
      %14 = sbr.rel (0) target = $region5
    $region4: #{tpu_custom_call.1} parent=1 // pred_region
      %s16 = ssub.s32 6400, 6400
      %17 = vsyncadd [#allocation5], %s16
      %s18 = sshll.u32 [#allocation4], 4
      %s19 = int_to_ptr.vmem [resolvable:$true] %s18
      %24 = dma.hbm_to_vmem [thread:$0]  %s1, 6400, %s19, [#allocation5], 128, 128, 8
    $region5: #{tpu_custom_call.1} parent=1 // pred_fallthru
      _
    // Predicated region
    $region6: #{tpu_custom_call.1} parent=1 // pred_check
      _
    $region7: #{tpu_custom_call.1} parent=1 // pred_check_branch
      %26 = sbr.rel (0) target = $region9
    $region8: #{tpu_custom_call.1} parent=1 // pred_region
      %27 = dma.done [#allocation5], 6400
    $region9: #{tpu_custom_call.1} parent=1 // pred_fallthru
      _
    %v28 = vlaneseq
    %v29 = vand.u32 %v28, 127
    %s30 = sld [smem:[#allocation3]]
    %v31 = vstv %s30
    %vm32 = vcmp.eq.s32.totalorder %v29, %v31
    %v33 = vsel %vm32, 1, 0
    %v34 = vcvt.s32.f32 %v33
    %s35 = sld [smem:[#allocation3 + $0x1]]
    %v36 = vstv %s35
    %vm37 = vcmp.eq.s32.totalorder %v29, %v36
    %v38 = vsel %vm37, 1, 0
    %v39 = vcvt.s32.f32 %v38
    %s40 = sld [smem:[#allocation3 + $0x2]]
    %v41 = vstv %s40
    %vm42 = vcmp.eq.s32.totalorder %v29, %v41
    %v43 = vsel %vm42, 1, 0
    %v44 = vcvt.s32.f32 %v43
    %s45 = sld [smem:[#allocation3 + $0x3]]
    %v46 = vstv %s45
    %vm47 = vcmp.eq.s32.totalorder %v29, %v46
    %v48 = vsel %vm47, 1, 0
    %v49 = vcvt.s32.f32 %v48
    %s50 = sld [smem:[#allocation3 + $0x4]]
    %v51 = vstv %s50
    %vm52 = vcmp.eq.s32.totalorder %v29, %v51
    %v53 = vsel %vm52, 1, 0
    %v54 = vcvt.s32.f32 %v53
    %s55 = sld [smem:[#allocation3 + $0x5]]
    %v56 = vstv %s55
    %vm57 = vcmp.eq.s32.totalorder %v29, %v56
    %v58 = vsel %vm57, 1, 0
    %v59 = vcvt.s32.f32 %v58
    %s60 = sld [smem:[#allocation3 + $0x6]]
    %v61 = vstv %s60
    %vm62 = vcmp.eq.s32.totalorder %v29, %v61
    %v63 = vsel %vm62, 1, 0
    %v64 = vcvt.s32.f32 %v63
    %s65 = sld [smem:[#allocation3 + $0x7]]
    %v66 = vstv %s65
    %vm67 = vcmp.eq.s32.totalorder %v29, %v66
    %v68 = vsel %vm67, 1, 0
    %v69 = vcvt.s32.f32 %v68
    %vm70 = vcmask 1040384
    %v71 = vsel %vm70, %v34, %v39
    %vm72 = vcmask 1041408
    %v73 = vsel %vm72, %v71, %v44
    %vm74 = vcmask 1042432
    %v75 = vsel %vm74, %v73, %v49
    %vm76 = vcmask 1043456
    %v77 = vsel %vm76, %v75, %v54
    %vm78 = vcmask 1044480
    %v79 = vsel %vm78, %v77, %v59
    %vm80 = vcmask 1045504
    %v81 = vsel %vm80, %v79, %v64
    %vm82 = vcmask 1046528
    %v83 = vsel %vm82, %v81, %v69
    %v84 = vld [vmem:[#allocation4] sm:$0xff]
    %v85 = vld [vmem:[#allocation4 + $0x8] sm:$0xff]
    %v86 = vld [vmem:[#allocation4 + $0x10] sm:$0xff]
    %v87 = vld [vmem:[#allocation4 + $0x18] sm:$0xff]
    %v88 = vld [vmem:[#allocation4 + $0x20] sm:$0xff]
    %v89 = vld [vmem:[#allocation4 + $0x28] sm:$0xff]
    %v90 = vld [vmem:[#allocation4 + $0x30] sm:$0xff]
    %v91 = vld [vmem:[#allocation4 + $0x38] sm:$0xff]
    %vm92 = vcmask 523264
    %v94 = vsel %vm92, %v83, 0
    %96 = vmatprep.subr.mxu0 0.0
    %97 = vmatpush1.msra.mxu0 %v84
    %98 = vmatprep.subr.mxu0 0.0
    %99 = vmatpush1.msra.mxu0 %v85
    %100 = vmatprep.subr.mxu0 0.0
    %101 = vmatpush1.msra.mxu0 %v86
    %102 = vmatprep.subr.mxu0 0.0
    %103 = vmatpush1.msra.mxu0 %v87
    %104 = vmatprep.subr.mxu0 0.0
    %105 = vmatpush1.msra.mxu0 %v88
    %106 = vmatprep.subr.mxu0 0.0
    %107 = vmatpush1.msra.mxu0 %v89
    %108 = vmatprep.subr.mxu0 0.0
    %109 = vmatpush1.msra.mxu0 %v90
    %110 = vmatprep.subr.mxu0 0.0
    %111 = vmatpush1.msra.mxu0 %v91
    %112 = vmatprep.subr.mxu0 0.0
    %113 = vmatpush1.msra.mxu0 0.0
    %114 = vmatprep.subr.mxu0 0.0
    %115 = vmatpush1.msra.mxu0 0.0
    %116 = vmatprep.subr.mxu0 0.0
    %117 = vmatpush1.msra.mxu0 0.0
    %118 = vmatprep.subr.mxu0 0.0
    %119 = vmatpush1.msra.mxu0 0.0
    %120 = vmatprep.subr.mxu0 0.0
    %121 = vmatpush1.msra.mxu0 0.0
    %122 = vmatprep.subr.mxu0 0.0
    %123 = vmatpush1.msra.mxu0 0.0
    %124 = vmatprep.subr.mxu0 0.0
    %125 = vmatpush1.msra.mxu0 0.0
    %126 = vmatprep.subr.mxu0 0.0
    %127 = vmatpush1.msra.mxu0 0.0
    %128 = vmatprep.subr.mxu0 0.0
    %129 = vmatpush1.msra.mxu0 0.0
    %130 = vmatprep.subr.mxu0 0.0
    %131 = vmatpush1.msra.mxu0 0.0
    %132 = vmatprep.subr.mxu0 0.0
    %133 = vmatpush1.msra.mxu0 0.0
    %134 = vmatprep.subr.mxu0 0.0
    %135 = vmatpush1.msra.mxu0 0.0
    %136 = vmatprep.subr.mxu0 0.0
    %137 = vmatpush1.msra.mxu0 0.0
    %138 = vmatprep.subr.mxu0 0.0
    %139 = vmatpush1.msra.mxu0 0.0
    %140 = vmatprep.subr.mxu0 0.0
    %141 = vmatpush1.msra.mxu0 0.0
    %142 = vmatprep.subr.mxu0 0.0
    %143 = vmatpush1.msra.mxu0 0.0
    %144 = vmatprep.subr.mxu0 0.0
    %145 = vmatpush1.msra.mxu0 0.0
    %146 = vmatprep.subr.mxu0 0.0
    %147 = vmatpush1.msra.mxu0 0.0
    %148 = vmatprep.subr.mxu0 0.0
    %149 = vmatpush1.msra.mxu0 0.0
    %150 = vmatprep.subr.mxu0 0.0
    %151 = vmatpush1.msra.mxu0 0.0
    %152 = vmatprep.subr.mxu0 0.0
    %153 = vmatpush1.msra.mxu0 0.0
    %154 = vmatprep.subr.mxu0 0.0
    %155 = vmatpush1.msra.mxu0 0.0
    %156 = vmatprep.subr.mxu0 0.0
    %157 = vmatpush1.msra.mxu0 0.0
    %158 = vmatprep.subr.mxu0 0.0
    %159 = vmatpush1.msra.mxu0 0.0
    %160 = vmatprep.mubr.f32.mxu0 0.0
    %161 = vmatmul.mubr.f32.gmra.mrb[0].mxu0 %v94
    %v162 = vpop.f32.mrb[0].mxu0
    %v163 = vadd.f32 0.0, %v162
    %v164 = vpop.f32.mrb[0].mxu0
    %165 = vdwg.mxu0
    %v166 = vld [vmem:[#allocation4 + $0x40] sm:$0xff]
    %v167 = vld [vmem:[#allocation4 + $0x48] sm:$0xff]
    %v168 = vld [vmem:[#allocation4 + $0x50] sm:$0xff]
    %v169 = vld [vmem:[#allocation4 + $0x58] sm:$0xff]
    %v170 = vld [vmem:[#allocation4 + $0x60] sm:$0xff]
    %v171 = vld [vmem:[#allocation4 + $0x68] sm:$0xff]
    %v172 = vld [vmem:[#allocation4 + $0x70] sm:$0xff]
    %v173 = vld [vmem:[#allocation4 + $0x78] sm:$0xff]
    %v174 = vld [vmem:[#allocation4 + $0xc0] sm:$0xff]
    %v175 = vld [vmem:[#allocation4 + $0xc8] sm:$0xff]
    %v176 = vld [vmem:[#allocation4 + $0xd0] sm:$0xff]
    %v177 = vld [vmem:[#allocation4 + $0xd8] sm:$0xff]
    %v178 = vld [vmem:[#allocation4 + $0xe0] sm:$0xff]
    %v179 = vld [vmem:[#allocation4 + $0xe8] sm:$0xff]
    %v180 = vld [vmem:[#allocation4 + $0xf0] sm:$0xff]
    %v181 = vld [vmem:[#allocation4 + $0xf8] sm:$0xff]
    %v182 = vld [vmem:[#allocation4 + $0x140] sm:$0x1]
    %v183 = vlaneseq
    %v184 = vshrl.u32 %v183, 7
    %v185 = vsub.s32 0, %v184
    %v186 = vrot.slane %v182, %v185
    %v188 = vsel %vm92, %v163, 0
    %190 = vmatprep.subr.mxu0 0.0
    %191 = vmatpush1.msra.mxu0 %v166
    %192 = vmatprep.subr.mxu0 0.0
    %193 = vmatpush1.msra.mxu0 %v167
    %194 = vmatprep.subr.mxu0 0.0
    %195 = vmatpush1.msra.mxu0 %v168
    %196 = vmatprep.subr.mxu0 0.0
    %197 = vmatpush1.msra.mxu0 %v169
    %198 = vmatprep.subr.mxu0 0.0
    %199 = vmatpush1.msra.mxu0 %v170
    %200 = vmatprep.subr.mxu0 0.0
    %201 = vmatpush1.msra.mxu0 %v171
    %202 = vmatprep.subr.mxu0 0.0
    %203 = vmatpush1.msra.mxu0 %v172
    %204 = vmatprep.subr.mxu0 0.0
    %205 = vmatpush1.msra.mxu0 %v173
    %206 = vmatprep.subr.mxu0 0.0
    %207 = vmatpush1.msra.mxu0 0.0
    %208 = vmatprep.subr.mxu0 0.0
    %209 = vmatpush1.msra.mxu0 0.0
    %210 = vmatprep.subr.mxu0 0.0
    %211 = vmatpush1.msra.mxu0 0.0
    %212 = vmatprep.subr.mxu0 0.0
    %213 = vmatpush1.msra.mxu0 0.0
    %214 = vmatprep.subr.mxu0 0.0
    %215 = vmatpush1.msra.mxu0 0.0
    %216 = vmatprep.subr.mxu0 0.0
    %217 = vmatpush1.msra.mxu0 0.0
    %218 = vmatprep.subr.mxu0 0.0
    %219 = vmatpush1.msra.mxu0 0.0
    %220 = vmatprep.subr.mxu0 0.0
    %221 = vmatpush1.msra.mxu0 0.0
    %222 = vmatprep.subr.mxu0 0.0
    %223 = vmatpush1.msra.mxu0 0.0
    %224 = vmatprep.subr.mxu0 0.0
    %225 = vmatpush1.msra.mxu0 0.0
    %226 = vmatprep.subr.mxu0 0.0
    %227 = vmatpush1.msra.mxu0 0.0
    %228 = vmatprep.subr.mxu0 0.0
    %229 = vmatpush1.msra.mxu0 0.0
    %230 = vmatprep.subr.mxu0 0.0
    %231 = vmatpush1.msra.mxu0 0.0
    %232 = vmatprep.subr.mxu0 0.0
    %233 = vmatpush1.msra.mxu0 0.0
    %234 = vmatprep.subr.mxu0 0.0
    %235 = vmatpush1.msra.mxu0 0.0
    %236 = vmatprep.subr.mxu0 0.0
    %237 = vmatpush1.msra.mxu0 0.0
    %238 = vmatprep.subr.mxu0 0.0
    %239 = vmatpush1.msra.mxu0 0.0
    %240 = vmatprep.subr.mxu0 0.0
    %241 = vmatpush1.msra.mxu0 0.0
    %242 = vmatprep.subr.mxu0 0.0
    %243 = vmatpush1.msra.mxu0 0.0
    %244 = vmatprep.subr.mxu0 0.0
    %245 = vmatpush1.msra.mxu0 0.0
    %246 = vmatprep.subr.mxu0 0.0
    %247 = vmatpush1.msra.mxu0 0.0
    %248 = vmatprep.subr.mxu0 0.0
    %249 = vmatpush1.msra.mxu0 0.0
    %250 = vmatprep.subr.mxu0 0.0
    %251 = vmatpush1.msra.mxu0 0.0
    %252 = vmatprep.subr.mxu0 0.0
    %253 = vmatpush1.msra.mxu0 0.0
    %254 = vmatprep.mubr.f32.mxu0 0.0
    %255 = vmatmul.mubr.f32.gmra.mrb[0].mxu0 %v188
    %v256 = vpop.f32.mrb[0].mxu0
    %v257 = vadd.f32 %v186, %v256
    %v258 = vpop.f32.mrb[0].mxu0
    %259 = vdwg.mxu0
    %v261 = vrot.slane %v257, 7
    %v263 = vrot.slane %v257, 5
    %v265 = vrot.slane %v257, 3
    %v267 = vrot.slane %v257, 1
    %v269 = vsel %vm70, %v261, %v263
    %v270 = vsel %vm72, %v269, %v265
    %v271 = vsel %vm74, %v270, %v267
    %v272 = vsel %vm76, %v271, %v261
    %v273 = vsel %vm78, %v272, %v263
    %v274 = vsel %vm80, %v273, %v265
    %v275 = vsel %vm82, %v274, %v267
    %vm276 = vcmask 261120
    %v277 = vsel %vm276, %v257, %v275
    %v279 = vsel %vm92, 0.0, 0
    %281 = vmatprep.subr.mxu0 0.0
    %282 = vmatpush1.msra.mxu0 %v174
    %283 = vmatprep.subr.mxu0 0.0
    %284 = vmatpush1.msra.mxu0 %v175
    %285 = vmatprep.subr.mxu0 0.0
    %286 = vmatpush1.msra.mxu0 %v176
    %287 = vmatprep.subr.mxu0 0.0
    %288 = vmatpush1.msra.mxu0 %v177
    %289 = vmatprep.subr.mxu0 0.0
    %290 = vmatpush1.msra.mxu0 %v178
    %291 = vmatprep.subr.mxu0 0.0
    %292 = vmatpush1.msra.mxu0 %v179
    %293 = vmatprep.subr.mxu0 0.0
    %294 = vmatpush1.msra.mxu0 %v180
    %295 = vmatprep.subr.mxu0 0.0
    %296 = vmatpush1.msra.mxu0 %v181
    %297 = vmatprep.subr.mxu0 0.0
    %298 = vmatpush1.msra.mxu0 0.0
    %299 = vmatprep.subr.mxu0 0.0
    %300 = vmatpush1.msra.mxu0 0.0
    %301 = vmatprep.subr.mxu0 0.0
    %302 = vmatpush1.msra.mxu0 0.0
    %303 = vmatprep.subr.mxu0 0.0
    %304 = vmatpush1.msra.mxu0 0.0
    %305 = vmatprep.subr.mxu0 0.0
    %306 = vmatpush1.msra.mxu0 0.0
    %307 = vmatprep.subr.mxu0 0.0
    %308 = vmatpush1.msra.mxu0 0.0
    %309 = vmatprep.subr.mxu0 0.0
    %310 = vmatpush1.msra.mxu0 0.0
    %311 = vmatprep.subr.mxu0 0.0
    %312 = vmatpush1.msra.mxu0 0.0
    %313 = vmatprep.subr.mxu0 0.0
    %314 = vmatpush1.msra.mxu0 0.0
    %315 = vmatprep.subr.mxu0 0.0
    %316 = vmatpush1.msra.mxu0 0.0
    %317 = vmatprep.subr.mxu0 0.0
    %318 = vmatpush1.msra.mxu0 0.0
    %319 = vmatprep.subr.mxu0 0.0
    %320 = vmatpush1.msra.mxu0 0.0
    %321 = vmatprep.subr.mxu0 0.0
    %322 = vmatpush1.msra.mxu0 0.0
    %323 = vmatprep.subr.mxu0 0.0
    %324 = vmatpush1.msra.mxu0 0.0
    %325 = vmatprep.subr.mxu0 0.0
    %326 = vmatpush1.msra.mxu0 0.0
    %327 = vmatprep.subr.mxu0 0.0
    %328 = vmatpush1.msra.mxu0 0.0
    %329 = vmatprep.subr.mxu0 0.0
    %330 = vmatpush1.msra.mxu0 0.0
    %331 = vmatprep.subr.mxu0 0.0
    %332 = vmatpush1.msra.mxu0 0.0
    %333 = vmatprep.subr.mxu0 0.0
    %334 = vmatpush1.msra.mxu0 0.0
    %335 = vmatprep.subr.mxu0 0.0
    %336 = vmatpush1.msra.mxu0 0.0
    %337 = vmatprep.subr.mxu0 0.0
    %338 = vmatpush1.msra.mxu0 0.0
    %339 = vmatprep.subr.mxu0 0.0
    %340 = vmatpush1.msra.mxu0 0.0
    %341 = vmatprep.subr.mxu0 0.0
    %342 = vmatpush1.msra.mxu0 0.0
    %343 = vmatprep.subr.mxu0 0.0
    %344 = vmatpush1.msra.mxu0 0.0
    %345 = vmatprep.mubr.f32.mxu0 0.0
    %346 = vmatmul.mubr.f32.gmra.mrb[0].mxu0 %v279
    %v347 = vpop.f32.mrb[0].mxu0
    %v348 = vadd.f32 0.0, %v347
    %v349 = vpop.f32.mrb[0].mxu0
    %350 = vdwg.mxu0
    %v351 = vadd.f32 %v277, %v348
    %v352 = vtanh.pop %v351
    %v354 = vsel %vm92, %v352, 0
    %356 = vmatprep.subr.mxu0 0.0
    %357 = vmatpush1.msra.mxu0 %v174
    %358 = vmatprep.subr.mxu0 0.0
    %359 = vmatpush1.msra.mxu0 %v175
    %360 = vmatprep.subr.mxu0 0.0
    %361 = vmatpush1.msra.mxu0 %v176
    %362 = vmatprep.subr.mxu0 0.0
    %363 = vmatpush1.msra.mxu0 %v177
    %364 = vmatprep.subr.mxu0 0.0
    %365 = vmatpush1.msra.mxu0 %v178
    %366 = vmatprep.subr.mxu0 0.0
    %367 = vmatpush1.msra.mxu0 %v179
    %368 = vmatprep.subr.mxu0 0.0
    %369 = vmatpush1.msra.mxu0 %v180
    %370 = vmatprep.subr.mxu0 0.0
    %371 = vmatpush1.msra.mxu0 %v181
    %372 = vmatprep.subr.mxu0 0.0
    %373 = vmatpush1.msra.mxu0 0.0
    %374 = vmatprep.subr.mxu0 0.0
    %375 = vmatpush1.msra.mxu0 0.0
    %376 = vmatprep.subr.mxu0 0.0
    %377 = vmatpush1.msra.mxu0 0.0
    %378 = vmatprep.subr.mxu0 0.0
    %379 = vmatpush1.msra.mxu0 0.0
    %380 = vmatprep.subr.mxu0 0.0
    %381 = vmatpush1.msra.mxu0 0.0
    %382 = vmatprep.subr.mxu0 0.0
    %383 = vmatpush1.msra.mxu0 0.0
    %384 = vmatprep.subr.mxu0 0.0
    %385 = vmatpush1.msra.mxu0 0.0
    %386 = vmatprep.subr.mxu0 0.0
    %387 = vmatpush1.msra.mxu0 0.0
    %388 = vmatprep.subr.mxu0 0.0
    %389 = vmatpush1.msra.mxu0 0.0
    %390 = vmatprep.subr.mxu0 0.0
    %391 = vmatpush1.msra.mxu0 0.0
    %392 = vmatprep.subr.mxu0 0.0
    %393 = vmatpush1.msra.mxu0 0.0
    %394 = vmatprep.subr.mxu0 0.0
    %395 = vmatpush1.msra.mxu0 0.0
    %396 = vmatprep.subr.mxu0 0.0
    %397 = vmatpush1.msra.mxu0 0.0
    %398 = vmatprep.subr.mxu0 0.0
    %399 = vmatpush1.msra.mxu0 0.0
    %400 = vmatprep.subr.mxu0 0.0
    %401 = vmatpush1.msra.mxu0 0.0
    %402 = vmatprep.subr.mxu0 0.0
    %403 = vmatpush1.msra.mxu0 0.0
    %404 = vmatprep.subr.mxu0 0.0
    %405 = vmatpush1.msra.mxu0 0.0
    %406 = vmatprep.subr.mxu0 0.0
    %407 = vmatpush1.msra.mxu0 0.0
    %408 = vmatprep.subr.mxu0 0.0
    %409 = vmatpush1.msra.mxu0 0.0
    %410 = vmatprep.subr.mxu0 0.0
    %411 = vmatpush1.msra.mxu0 0.0
    %412 = vmatprep.subr.mxu0 0.0
    %413 = vmatpush1.msra.mxu0 0.0
    %414 = vmatprep.subr.mxu0 0.0
    %415 = vmatpush1.msra.mxu0 0.0
    %416 = vmatprep.subr.mxu0 0.0
    %417 = vmatpush1.msra.mxu0 0.0
    %418 = vmatprep.subr.mxu0 0.0
    %419 = vmatpush1.msra.mxu0 0.0
    %420 = vmatprep.mubr.f32.mxu0 0.0
    %421 = vmatmul.mubr.f32.gmra.mrb[0].mxu0 %v354
    %v422 = vpop.f32.mrb[0].mxu0
    %v423 = vadd.f32 0.0, %v422
    %v424 = vpop.f32.mrb[0].mxu0
    %425 = vdwg.mxu0
    %v427 = vrot.slane %v423, 7
    %v429 = vadd.f32 %v277, %v427
    %v430 = vtanh.pop %v429
    %v432 = vrot.slane %v430, 1
    %v433 = vsel %vm92, %v432, 0
    %435 = vmatprep.subr.mxu0 0.0
    %436 = vmatpush1.msra.mxu0 %v174
    %437 = vmatprep.subr.mxu0 0.0
    %438 = vmatpush1.msra.mxu0 %v175
    %439 = vmatprep.subr.mxu0 0.0
    %440 = vmatpush1.msra.mxu0 %v176
    %441 = vmatprep.subr.mxu0 0.0
    %442 = vmatpush1.msra.mxu0 %v177
    %443 = vmatprep.subr.mxu0 0.0
    %444 = vmatpush1.msra.mxu0 %v178
    %445 = vmatprep.subr.mxu0 0.0
    %446 = vmatpush1.msra.mxu0 %v179
    %447 = vmatprep.subr.mxu0 0.0
    %448 = vmatpush1.msra.mxu0 %v180
    %449 = vmatprep.subr.mxu0 0.0
    %450 = vmatpush1.msra.mxu0 %v181
    %451 = vmatprep.subr.mxu0 0.0
    %452 = vmatpush1.msra.mxu0 0.0
    %453 = vmatprep.subr.mxu0 0.0
    %454 = vmatpush1.msra.mxu0 0.0
    %455 = vmatprep.subr.mxu0 0.0
    %456 = vmatpush1.msra.mxu0 0.0
    %457 = vmatprep.subr.mxu0 0.0
    %458 = vmatpush1.msra.mxu0 0.0
    %459 = vmatprep.subr.mxu0 0.0
    %460 = vmatpush1.msra.mxu0 0.0
    %461 = vmatprep.subr.mxu0 0.0
    %462 = vmatpush1.msra.mxu0 0.0
    %463 = vmatprep.subr.mxu0 0.0
    %464 = vmatpush1.msra.mxu0 0.0
    %465 = vmatprep.subr.mxu0 0.0
    %466 = vmatpush1.msra.mxu0 0.0
    %467 = vmatprep.subr.mxu0 0.0
    %468 = vmatpush1.msra.mxu0 0.0
    %469 = vmatprep.subr.mxu0 0.0
    %470 = vmatpush1.msra.mxu0 0.0
    %471 = vmatprep.subr.mxu0 0.0
    %472 = vmatpush1.msra.mxu0 0.0
    %473 = vmatprep.subr.mxu0 0.0
    %474 = vmatpush1.msra.mxu0 0.0
    %475 = vmatprep.subr.mxu0 0.0
    %476 = vmatpush1.msra.mxu0 0.0
    %477 = vmatprep.subr.mxu0 0.0
    %478 = vmatpush1.msra.mxu0 0.0
    %479 = vmatprep.subr.mxu0 0.0
    %480 = vmatpush1.msra.mxu0 0.0
    %481 = vmatprep.subr.mxu0 0.0
    %482 = vmatpush1.msra.mxu0 0.0
    %483 = vmatprep.subr.mxu0 0.0
    %484 = vmatpush1.msra.mxu0 0.0
    %485 = vmatprep.subr.mxu0 0.0
    %486 = vmatpush1.msra.mxu0 0.0
    %487 = vmatprep.subr.mxu0 0.0
    %488 = vmatpush1.msra.mxu0 0.0
    %489 = vmatprep.subr.mxu0 0.0
    %490 = vmatpush1.msra.mxu0 0.0
    %491 = vmatprep.subr.mxu0 0.0
    %492 = vmatpush1.msra.mxu0 0.0
    %493 = vmatprep.subr.mxu0 0.0
    %494 = vmatpush1.msra.mxu0 0.0
    %495 = vmatprep.subr.mxu0 0.0
    %496 = vmatpush1.msra.mxu0 0.0
    %497 = vmatprep.subr.mxu0 0.0
    %498 = vmatpush1.msra.mxu0 0.0
    %499 = vmatprep.mubr.f32.mxu0 0.0
    %500 = vmatmul.mubr.f32.gmra.mrb[0].mxu0 %v433
    %v501 = vpop.f32.mrb[0].mxu0
    %v502 = vadd.f32 0.0, %v501
    %v503 = vpop.f32.mrb[0].mxu0
    %504 = vdwg.mxu0
    %v506 = vrot.slane %v502, 6
    %v508 = vadd.f32 %v277, %v506
    %v509 = vtanh.pop %v508
    %v511 = vrot.slane %v509, 2
    %v512 = vsel %vm92, %v511, 0
    %514 = vmatprep.subr.mxu0 0.0
    %515 = vmatpush1.msra.mxu0 %v174
    %516 = vmatprep.subr.mxu0 0.0
    %517 = vmatpush1.msra.mxu0 %v175
    %518 = vmatprep.subr.mxu0 0.0
    %519 = vmatpush1.msra.mxu0 %v176
    %520 = vmatprep.subr.mxu0 0.0
    %521 = vmatpush1.msra.mxu0 %v177
    %522 = vmatprep.subr.mxu0 0.0
    %523 = vmatpush1.msra.mxu0 %v178
    %524 = vmatprep.subr.mxu0 0.0
    %525 = vmatpush1.msra.mxu0 %v179
    %526 = vmatprep.subr.mxu0 0.0
    %527 = vmatpush1.msra.mxu0 %v180
    %528 = vmatprep.subr.mxu0 0.0
    %529 = vmatpush1.msra.mxu0 %v181
    %530 = vmatprep.subr.mxu0 0.0
    %531 = vmatpush1.msra.mxu0 0.0
    %532 = vmatprep.subr.mxu0 0.0
    %533 = vmatpush1.msra.mxu0 0.0
    %534 = vmatprep.subr.mxu0 0.0
    %535 = vmatpush1.msra.mxu0 0.0
    %536 = vmatprep.subr.mxu0 0.0
    %537 = vmatpush1.msra.mxu0 0.0
    %538 = vmatprep.subr.mxu0 0.0
    %539 = vmatpush1.msra.mxu0 0.0
    %540 = vmatprep.subr.mxu0 0.0
    %541 = vmatpush1.msra.mxu0 0.0
    %542 = vmatprep.subr.mxu0 0.0
    %543 = vmatpush1.msra.mxu0 0.0
    %544 = vmatprep.subr.mxu0 0.0
    %545 = vmatpush1.msra.mxu0 0.0
    %546 = vmatprep.subr.mxu0 0.0
    %547 = vmatpush1.msra.mxu0 0.0
    %548 = vmatprep.subr.mxu0 0.0
    %549 = vmatpush1.msra.mxu0 0.0
    %550 = vmatprep.subr.mxu0 0.0
    %551 = vmatpush1.msra.mxu0 0.0
    %552 = vmatprep.subr.mxu0 0.0
    %553 = vmatpush1.msra.mxu0 0.0
    %554 = vmatprep.subr.mxu0 0.0
    %555 = vmatpush1.msra.mxu0 0.0
    %556 = vmatprep.subr.mxu0 0.0
    %557 = vmatpush1.msra.mxu0 0.0
    %558 = vmatprep.subr.mxu0 0.0
    %559 = vmatpush1.msra.mxu0 0.0
    %560 = vmatprep.subr.mxu0 0.0
    %561 = vmatpush1.msra.mxu0 0.0
    %562 = vmatprep.subr.mxu0 0.0
    %563 = vmatpush1.msra.mxu0 0.0
    %564 = vmatprep.subr.mxu0 0.0
    %565 = vmatpush1.msra.mxu0 0.0
    %566 = vmatprep.subr.mxu0 0.0
    %567 = vmatpush1.msra.mxu0 0.0
    %568 = vmatprep.subr.mxu0 0.0
    %569 = vmatpush1.msra.mxu0 0.0
    %570 = vmatprep.subr.mxu0 0.0
    %571 = vmatpush1.msra.mxu0 0.0
    %572 = vmatprep.subr.mxu0 0.0
    %573 = vmatpush1.msra.mxu0 0.0
    %574 = vmatprep.subr.mxu0 0.0
    %575 = vmatpush1.msra.mxu0 0.0
    %576 = vmatprep.subr.mxu0 0.0
    %577 = vmatpush1.msra.mxu0 0.0
    %578 = vmatprep.mubr.f32.mxu0 0.0
    %579 = vmatmul.mubr.f32.gmra.mrb[0].mxu0 %v512
    %v580 = vpop.f32.mrb[0].mxu0
    %v581 = vadd.f32 0.0, %v580
    %v582 = vpop.f32.mrb[0].mxu0
    %583 = vdwg.mxu0
    %v585 = vrot.slane %v581, 5
    %v587 = vadd.f32 %v277, %v585
    %v588 = vtanh.pop %v587
    %v590 = vrot.slane %v588, 3
    %v591 = vsel %vm92, %v590, 0
    %593 = vmatprep.subr.mxu0 0.0
    %594 = vmatpush1.msra.mxu0 %v174
    %595 = vmatprep.subr.mxu0 0.0
    %596 = vmatpush1.msra.mxu0 %v175
    %597 = vmatprep.subr.mxu0 0.0
    %598 = vmatpush1.msra.mxu0 %v176
    %599 = vmatprep.subr.mxu0 0.0
    %600 = vmatpush1.msra.mxu0 %v177
    %601 = vmatprep.subr.mxu0 0.0
    %602 = vmatpush1.msra.mxu0 %v178
    %603 = vmatprep.subr.mxu0 0.0
    %604 = vmatpush1.msra.mxu0 %v179
    %605 = vmatprep.subr.mxu0 0.0
    %606 = vmatpush1.msra.mxu0 %v180
    %607 = vmatprep.subr.mxu0 0.0
    %608 = vmatpush1.msra.mxu0 %v181
    %609 = vmatprep.subr.mxu0 0.0
    %610 = vmatpush1.msra.mxu0 0.0
    %611 = vmatprep.subr.mxu0 0.0
    %612 = vmatpush1.msra.mxu0 0.0
    %613 = vmatprep.subr.mxu0 0.0
    %614 = vmatpush1.msra.mxu0 0.0
    %615 = vmatprep.subr.mxu0 0.0
    %616 = vmatpush1.msra.mxu0 0.0
    %617 = vmatprep.subr.mxu0 0.0
    %618 = vmatpush1.msra.mxu0 0.0
    %619 = vmatprep.subr.mxu0 0.0
    %620 = vmatpush1.msra.mxu0 0.0
    %621 = vmatprep.subr.mxu0 0.0
    %622 = vmatpush1.msra.mxu0 0.0
    %623 = vmatprep.subr.mxu0 0.0
    %624 = vmatpush1.msra.mxu0 0.0
    %625 = vmatprep.subr.mxu0 0.0
    %626 = vmatpush1.msra.mxu0 0.0
    %627 = vmatprep.subr.mxu0 0.0
    %628 = vmatpush1.msra.mxu0 0.0
    %629 = vmatprep.subr.mxu0 0.0
    %630 = vmatpush1.msra.mxu0 0.0
    %631 = vmatprep.subr.mxu0 0.0
    %632 = vmatpush1.msra.mxu0 0.0
    %633 = vmatprep.subr.mxu0 0.0
    %634 = vmatpush1.msra.mxu0 0.0
    %635 = vmatprep.subr.mxu0 0.0
    %636 = vmatpush1.msra.mxu0 0.0
    %637 = vmatprep.subr.mxu0 0.0
    %638 = vmatpush1.msra.mxu0 0.0
    %639 = vmatprep.subr.mxu0 0.0
    %640 = vmatpush1.msra.mxu0 0.0
    %641 = vmatprep.subr.mxu0 0.0
    %642 = vmatpush1.msra.mxu0 0.0
    %643 = vmatprep.subr.mxu0 0.0
    %644 = vmatpush1.msra.mxu0 0.0
    %645 = vmatprep.subr.mxu0 0.0
    %646 = vmatpush1.msra.mxu0 0.0
    %647 = vmatprep.subr.mxu0 0.0
    %648 = vmatpush1.msra.mxu0 0.0
    %649 = vmatprep.subr.mxu0 0.0
    %650 = vmatpush1.msra.mxu0 0.0
    %651 = vmatprep.subr.mxu0 0.0
    %652 = vmatpush1.msra.mxu0 0.0
    %653 = vmatprep.subr.mxu0 0.0
    %654 = vmatpush1.msra.mxu0 0.0
    %655 = vmatprep.subr.mxu0 0.0
    %656 = vmatpush1.msra.mxu0 0.0
    %657 = vmatprep.mubr.f32.mxu0 0.0
    %658 = vmatmul.mubr.f32.gmra.mrb[0].mxu0 %v591
    %v659 = vpop.f32.mrb[0].mxu0
    %v660 = vadd.f32 0.0, %v659
    %v661 = vpop.f32.mrb[0].mxu0
    %662 = vdwg.mxu0
    %v664 = vrot.slane %v660, 4
    %v666 = vadd.f32 %v277, %v664
    %v667 = vtanh.pop %v666
    %v669 = vrot.slane %v667, 4
    %v670 = vsel %vm92, %v669, 0
    %672 = vmatprep.subr.mxu0 0.0
    %673 = vmatpush1.msra.mxu0 %v174
    %674 = vmatprep.subr.mxu0 0.0
    %675 = vmatpush1.msra.mxu0 %v175
    %676 = vmatprep.subr.mxu0 0.0
    %677 = vmatpush1.msra.mxu0 %v176
    %678 = vmatprep.subr.mxu0 0.0
    %679 = vmatpush1.msra.mxu0 %v177
    %680 = vmatprep.subr.mxu0 0.0
    %681 = vmatpush1.msra.mxu0 %v178
    %682 = vmatprep.subr.mxu0 0.0
    %683 = vmatpush1.msra.mxu0 %v179
    %684 = vmatprep.subr.mxu0 0.0
    %685 = vmatpush1.msra.mxu0 %v180
    %686 = vmatprep.subr.mxu0 0.0
    %687 = vmatpush1.msra.mxu0 %v181
    %688 = vmatprep.subr.mxu0 0.0
    %689 = vmatpush1.msra.mxu0 0.0
    %690 = vmatprep.subr.mxu0 0.0
    %691 = vmatpush1.msra.mxu0 0.0
    %692 = vmatprep.subr.mxu0 0.0
    %693 = vmatpush1.msra.mxu0 0.0
    %694 = vmatprep.subr.mxu0 0.0
    %695 = vmatpush1.msra.mxu0 0.0
    %696 = vmatprep.subr.mxu0 0.0
    %697 = vmatpush1.msra.mxu0 0.0
    %698 = vmatprep.subr.mxu0 0.0
    %699 = vmatpush1.msra.mxu0 0.0
    %700 = vmatprep.subr.mxu0 0.0
    %701 = vmatpush1.msra.mxu0 0.0
    %702 = vmatprep.subr.mxu0 0.0
    %703 = vmatpush1.msra.mxu0 0.0
    %704 = vmatprep.subr.mxu0 0.0
    %705 = vmatpush1.msra.mxu0 0.0
    %706 = vmatprep.subr.mxu0 0.0
    %707 = vmatpush1.msra.mxu0 0.0
    %708 = vmatprep.subr.mxu0 0.0
    %709 = vmatpush1.msra.mxu0 0.0
    %710 = vmatprep.subr.mxu0 0.0
    %711 = vmatpush1.msra.mxu0 0.0
    %712 = vmatprep.subr.mxu0 0.0
    %713 = vmatpush1.msra.mxu0 0.0
    %714 = vmatprep.subr.mxu0 0.0
    %715 = vmatpush1.msra.mxu0 0.0
    %716 = vmatprep.subr.mxu0 0.0
    %717 = vmatpush1.msra.mxu0 0.0
    %718 = vmatprep.subr.mxu0 0.0
    %719 = vmatpush1.msra.mxu0 0.0
    %720 = vmatprep.subr.mxu0 0.0
    %721 = vmatpush1.msra.mxu0 0.0
    %722 = vmatprep.subr.mxu0 0.0
    %723 = vmatpush1.msra.mxu0 0.0
    %724 = vmatprep.subr.mxu0 0.0
    %725 = vmatpush1.msra.mxu0 0.0
    %726 = vmatprep.subr.mxu0 0.0
    %727 = vmatpush1.msra.mxu0 0.0
    %728 = vmatprep.subr.mxu0 0.0
    %729 = vmatpush1.msra.mxu0 0.0
    %730 = vmatprep.subr.mxu0 0.0
    %731 = vmatpush1.msra.mxu0 0.0
    %732 = vmatprep.subr.mxu0 0.0
    %733 = vmatpush1.msra.mxu0 0.0
    %734 = vmatprep.subr.mxu0 0.0
    %735 = vmatpush1.msra.mxu0 0.0
    %736 = vmatprep.mubr.f32.mxu0 0.0
    %737 = vmatmul.mubr.f32.gmra.mrb[0].mxu0 %v670
    %v738 = vpop.f32.mrb[0].mxu0
    %v739 = vadd.f32 0.0, %v738
    %v740 = vpop.f32.mrb[0].mxu0
    %741 = vdwg.mxu0
    %v743 = vrot.slane %v739, 3
    %v745 = vadd.f32 %v277, %v743
    %v746 = vtanh.pop %v745
    %v748 = vrot.slane %v746, 5
    %v749 = vsel %vm92, %v748, 0
    %751 = vmatprep.subr.mxu0 0.0
    %752 = vmatpush1.msra.mxu0 %v174
    %753 = vmatprep.subr.mxu0 0.0
    %754 = vmatpush1.msra.mxu0 %v175
    %755 = vmatprep.subr.mxu0 0.0
    %756 = vmatpush1.msra.mxu0 %v176
    %757 = vmatprep.subr.mxu0 0.0
    %758 = vmatpush1.msra.mxu0 %v177
    %759 = vmatprep.subr.mxu0 0.0
    %760 = vmatpush1.msra.mxu0 %v178
    %761 = vmatprep.subr.mxu0 0.0
    %762 = vmatpush1.msra.mxu0 %v179
    %763 = vmatprep.subr.mxu0 0.0
    %764 = vmatpush1.msra.mxu0 %v180
    %765 = vmatprep.subr.mxu0 0.0
    %766 = vmatpush1.msra.mxu0 %v181
    %767 = vmatprep.subr.mxu0 0.0
    %768 = vmatpush1.msra.mxu0 0.0
    %769 = vmatprep.subr.mxu0 0.0
    %770 = vmatpush1.msra.mxu0 0.0
    %771 = vmatprep.subr.mxu0 0.0
    %772 = vmatpush1.msra.mxu0 0.0
    %773 = vmatprep.subr.mxu0 0.0
    %774 = vmatpush1.msra.mxu0 0.0
    %775 = vmatprep.subr.mxu0 0.0
    %776 = vmatpush1.msra.mxu0 0.0
    %777 = vmatprep.subr.mxu0 0.0
    %778 = vmatpush1.msra.mxu0 0.0
    %779 = vmatprep.subr.mxu0 0.0
    %780 = vmatpush1.msra.mxu0 0.0
    %781 = vmatprep.subr.mxu0 0.0
    %782 = vmatpush1.msra.mxu0 0.0
    %783 = vmatprep.subr.mxu0 0.0
    %784 = vmatpush1.msra.mxu0 0.0
    %785 = vmatprep.subr.mxu0 0.0
    %786 = vmatpush1.msra.mxu0 0.0
    %787 = vmatprep.subr.mxu0 0.0
    %788 = vmatpush1.msra.mxu0 0.0
    %789 = vmatprep.subr.mxu0 0.0
    %790 = vmatpush1.msra.mxu0 0.0
    %791 = vmatprep.subr.mxu0 0.0
    %792 = vmatpush1.msra.mxu0 0.0
    %793 = vmatprep.subr.mxu0 0.0
    %794 = vmatpush1.msra.mxu0 0.0
    %795 = vmatprep.subr.mxu0 0.0
    %796 = vmatpush1.msra.mxu0 0.0
    %797 = vmatprep.subr.mxu0 0.0
    %798 = vmatpush1.msra.mxu0 0.0
    %799 = vmatprep.subr.mxu0 0.0
    %800 = vmatpush1.msra.mxu0 0.0
    %801 = vmatprep.subr.mxu0 0.0
    %802 = vmatpush1.msra.mxu0 0.0
    %803 = vmatprep.subr.mxu0 0.0
    %804 = vmatpush1.msra.mxu0 0.0
    %805 = vmatprep.subr.mxu0 0.0
    %806 = vmatpush1.msra.mxu0 0.0
    %807 = vmatprep.subr.mxu0 0.0
    %808 = vmatpush1.msra.mxu0 0.0
    %809 = vmatprep.subr.mxu0 0.0
    %810 = vmatpush1.msra.mxu0 0.0
    %811 = vmatprep.subr.mxu0 0.0
    %812 = vmatpush1.msra.mxu0 0.0
    %813 = vmatprep.subr.mxu0 0.0
    %814 = vmatpush1.msra.mxu0 0.0
    %815 = vmatprep.mubr.f32.mxu0 0.0
    %816 = vmatmul.mubr.f32.gmra.mrb[0].mxu0 %v749
    %v817 = vpop.f32.mrb[0].mxu0
    %v818 = vadd.f32 0.0, %v817
    %v819 = vpop.f32.mrb[0].mxu0
    %820 = vdwg.mxu0
    %v822 = vrot.slane %v818, 2
    %v824 = vadd.f32 %v277, %v822
    %v825 = vtanh.pop %v824
    %v827 = vrot.slane %v825, 6
    %v828 = vsel %vm92, %v827, 0
    %830 = vmatprep.subr.mxu0 0.0
    %831 = vmatpush1.msra.mxu0 %v174
    %832 = vmatprep.subr.mxu0 0.0
    %833 = vmatpush1.msra.mxu0 %v175
    %834 = vmatprep.subr.mxu0 0.0
    %835 = vmatpush1.msra.mxu0 %v176
    %836 = vmatprep.subr.mxu0 0.0
    %837 = vmatpush1.msra.mxu0 %v177
    %838 = vmatprep.subr.mxu0 0.0
    %839 = vmatpush1.msra.mxu0 %v178
    %840 = vmatprep.subr.mxu0 0.0
    %841 = vmatpush1.msra.mxu0 %v179
    %842 = vmatprep.subr.mxu0 0.0
    %843 = vmatpush1.msra.mxu0 %v180
    %844 = vmatprep.subr.mxu0 0.0
    %845 = vmatpush1.msra.mxu0 %v181
    %846 = vmatprep.subr.mxu0 0.0
    %847 = vmatpush1.msra.mxu0 0.0
    %848 = vmatprep.subr.mxu0 0.0
    %849 = vmatpush1.msra.mxu0 0.0
    %850 = vmatprep.subr.mxu0 0.0
    %851 = vmatpush1.msra.mxu0 0.0
    %852 = vmatprep.subr.mxu0 0.0
    %853 = vmatpush1.msra.mxu0 0.0
    %854 = vmatprep.subr.mxu0 0.0
    %855 = vmatpush1.msra.mxu0 0.0
    %856 = vmatprep.subr.mxu0 0.0
    %857 = vmatpush1.msra.mxu0 0.0
    %858 = vmatprep.subr.mxu0 0.0
    %859 = vmatpush1.msra.mxu0 0.0
    %860 = vmatprep.subr.mxu0 0.0
    %861 = vmatpush1.msra.mxu0 0.0
    %862 = vmatprep.subr.mxu0 0.0
    %863 = vmatpush1.msra.mxu0 0.0
    %864 = vmatprep.subr.mxu0 0.0
    %865 = vmatpush1.msra.mxu0 0.0
    %866 = vmatprep.subr.mxu0 0.0
    %867 = vmatpush1.msra.mxu0 0.0
    %868 = vmatprep.subr.mxu0 0.0
    %869 = vmatpush1.msra.mxu0 0.0
    %870 = vmatprep.subr.mxu0 0.0
    %871 = vmatpush1.msra.mxu0 0.0
    %872 = vmatprep.subr.mxu0 0.0
    %873 = vmatpush1.msra.mxu0 0.0
    %874 = vmatprep.subr.mxu0 0.0
    %875 = vmatpush1.msra.mxu0 0.0
    %876 = vmatprep.subr.mxu0 0.0
    %877 = vmatpush1.msra.mxu0 0.0
    %878 = vmatprep.subr.mxu0 0.0
    %879 = vmatpush1.msra.mxu0 0.0
    %880 = vmatprep.subr.mxu0 0.0
    %881 = vmatpush1.msra.mxu0 0.0
    %882 = vmatprep.subr.mxu0 0.0
    %883 = vmatpush1.msra.mxu0 0.0
    %884 = vmatprep.subr.mxu0 0.0
    %885 = vmatpush1.msra.mxu0 0.0
    %886 = vmatprep.subr.mxu0 0.0
    %887 = vmatpush1.msra.mxu0 0.0
    %888 = vmatprep.subr.mxu0 0.0
    %889 = vmatpush1.msra.mxu0 0.0
    %890 = vmatprep.subr.mxu0 0.0
    %891 = vmatpush1.msra.mxu0 0.0
    %892 = vmatprep.subr.mxu0 0.0
    %893 = vmatpush1.msra.mxu0 0.0
    %894 = vmatprep.mubr.f32.mxu0 0.0
    %895 = vmatmul.mubr.f32.gmra.mrb[0].mxu0 %v828
    %v896 = vpop.f32.mrb[0].mxu0
    %v897 = vadd.f32 0.0, %v896
    %v898 = vpop.f32.mrb[0].mxu0
    %899 = vdwg.mxu0
    %v901 = vrot.slane %v897, 1
    %v903 = vadd.f32 %v277, %v901
    %v904 = vtanh.pop %v903
    %v905 = vsel %vm70, %v352, %v430
    %v906 = vsel %vm72, %v905, %v509
    %v907 = vsel %vm74, %v906, %v588
    %v908 = vsel %vm76, %v907, %v667
    %v909 = vsel %vm78, %v908, %v746
    %v910 = vsel %vm80, %v909, %v825
    %v911 = vsel %vm82, %v910, %v904
    %v913 = vrot.slane %v904, 7
    %v915 = vrot.slane %v825, 5
    %v917 = vrot.slane %v746, 3
    %v919 = vrot.slane %v667, 1
    %v921 = vrot.slane %v588, 7
    %v923 = vrot.slane %v509, 5
    %v925 = vrot.slane %v430, 3
    %v927 = vrot.slane %v352, 1
    %v929 = vsel %vm70, %v913, %v915
    %v930 = vsel %vm72, %v929, %v917
    %v931 = vsel %vm74, %v930, %v919
    %v932 = vsel %vm76, %v931, %v921
    %v933 = vsel %vm78, %v932, %v923
    %v934 = vsel %vm80, %v933, %v925
    %v935 = vsel %vm82, %v934, %v927
    %v936 = vsel %vm276, %v911, %v935
    %v937 = vld [vmem:[#allocation4 + $0x80] sm:$0xff]
    %v938 = vld [vmem:[#allocation4 + $0x88] sm:$0xff]
    %v939 = vld [vmem:[#allocation4 + $0x90] sm:$0xff]
    %v940 = vld [vmem:[#allocation4 + $0x98] sm:$0xff]
    %v941 = vld [vmem:[#allocation4 + $0xa0] sm:$0xff]
    %v942 = vld [vmem:[#allocation4 + $0xa8] sm:$0xff]
    %v943 = vld [vmem:[#allocation4 + $0xb0] sm:$0xff]
    %v944 = vld [vmem:[#allocation4 + $0xb8] sm:$0xff]
    %v945 = vld [vmem:[#allocation4 + $0x100] sm:$0xff]
    %v946 = vld [vmem:[#allocation4 + $0x108] sm:$0xff]
    %v947 = vld [vmem:[#allocation4 + $0x110] sm:$0xff]
    %v948 = vld [vmem:[#allocation4 + $0x118] sm:$0xff]
    %v949 = vld [vmem:[#allocation4 + $0x120] sm:$0xff]
    %v950 = vld [vmem:[#allocation4 + $0x128] sm:$0xff]
    %v951 = vld [vmem:[#allocation4 + $0x130] sm:$0xff]
    %v952 = vld [vmem:[#allocation4 + $0x138] sm:$0xff]
    %v953 = vld [vmem:[#allocation4 + $0x141] sm:$0x1]
    %v954 = vlaneseq
    %v955 = vshrl.u32 %v954, 7
    %v956 = vsub.s32 0, %v955
    %v957 = vrot.slane %v953, %v956
    %v959 = vsel %vm92, %v936, 0
    %961 = vmatprep.subr.mxu0 0.0
    %962 = vmatpush1.msra.mxu0 %v937
    %963 = vmatprep.subr.mxu0 0.0
    %964 = vmatpush1.msra.mxu0 %v938
    %965 = vmatprep.subr.mxu0 0.0
    %966 = vmatpush1.msra.mxu0 %v939
    %967 = vmatprep.subr.mxu0 0.0
    %968 = vmatpush1.msra.mxu0 %v940
    %969 = vmatprep.subr.mxu0 0.0
    %970 = vmatpush1.msra.mxu0 %v941
    %971 = vmatprep.subr.mxu0 0.0
    %972 = vmatpush1.msra.mxu0 %v942
    %973 = vmatprep.subr.mxu0 0.0
    %974 = vmatpush1.msra.mxu0 %v943
    %975 = vmatprep.subr.mxu0 0.0
    %976 = vmatpush1.msra.mxu0 %v944
    %977 = vmatprep.subr.mxu0 0.0
    %978 = vmatpush1.msra.mxu0 0.0
    %979 = vmatprep.subr.mxu0 0.0
    %980 = vmatpush1.msra.mxu0 0.0
    %981 = vmatprep.subr.mxu0 0.0
    %982 = vmatpush1.msra.mxu0 0.0
    %983 = vmatprep.subr.mxu0 0.0
    %984 = vmatpush1.msra.mxu0 0.0
    %985 = vmatprep.subr.mxu0 0.0
    %986 = vmatpush1.msra.mxu0 0.0
    %987 = vmatprep.subr.mxu0 0.0
    %988 = vmatpush1.msra.mxu0 0.0
    %989 = vmatprep.subr.mxu0 0.0
    %990 = vmatpush1.msra.mxu0 0.0
    %991 = vmatprep.subr.mxu0 0.0
    %992 = vmatpush1.msra.mxu0 0.0
    %993 = vmatprep.subr.mxu0 0.0
    %994 = vmatpush1.msra.mxu0 0.0
    %995 = vmatprep.subr.mxu0 0.0
    %996 = vmatpush1.msra.mxu0 0.0
    %997 = vmatprep.subr.mxu0 0.0
    %998 = vmatpush1.msra.mxu0 0.0
    %999 = vmatprep.subr.mxu0 0.0
    %1000 = vmatpush1.msra.mxu0 0.0
    %1001 = vmatprep.subr.mxu0 0.0
    %1002 = vmatpush1.msra.mxu0 0.0
    %1003 = vmatprep.subr.mxu0 0.0
    %1004 = vmatpush1.msra.mxu0 0.0
    %1005 = vmatprep.subr.mxu0 0.0
    %1006 = vmatpush1.msra.mxu0 0.0
    %1007 = vmatprep.subr.mxu0 0.0
    %1008 = vmatpush1.msra.mxu0 0.0
    %1009 = vmatprep.subr.mxu0 0.0
    %1010 = vmatpush1.msra.mxu0 0.0
    %1011 = vmatprep.subr.mxu0 0.0
    %1012 = vmatpush1.msra.mxu0 0.0
    %1013 = vmatprep.subr.mxu0 0.0
    %1014 = vmatpush1.msra.mxu0 0.0
    %1015 = vmatprep.subr.mxu0 0.0
    %1016 = vmatpush1.msra.mxu0 0.0
    %1017 = vmatprep.subr.mxu0 0.0
    %1018 = vmatpush1.msra.mxu0 0.0
    %1019 = vmatprep.subr.mxu0 0.0
    %1020 = vmatpush1.msra.mxu0 0.0
    %1021 = vmatprep.subr.mxu0 0.0
    %1022 = vmatpush1.msra.mxu0 0.0
    %1023 = vmatprep.subr.mxu0 0.0
    %1024 = vmatpush1.msra.mxu0 0.0
    %1025 = vmatprep.mubr.f32.mxu0 0.0
    %1026 = vmatmul.mubr.f32.gmra.mrb[0].mxu0 %v959
    %v1027 = vpop.f32.mrb[0].mxu0
    %v1028 = vadd.f32 %v957, %v1027
    %v1029 = vpop.f32.mrb[0].mxu0
    %1030 = vdwg.mxu0
    %v1032 = vrot.slane %v1028, 7
    %v1034 = vrot.slane %v1028, 5
    %v1036 = vrot.slane %v1028, 3
    %v1038 = vrot.slane %v1028, 1
    %v1040 = vsel %vm70, %v1032, %v1034
    %v1041 = vsel %vm72, %v1040, %v1036
    %v1042 = vsel %vm74, %v1041, %v1038
    %v1043 = vsel %vm76, %v1042, %v1032
    %v1044 = vsel %vm78, %v1043, %v1034
    %v1045 = vsel %vm80, %v1044, %v1036
    %v1046 = vsel %vm82, %v1045, %v1038
    %v1047 = vsel %vm276, %v1028, %v1046
    %1048 = vmatprep.subr.mxu0 0.0
    %1049 = vmatpush1.msra.mxu0 %v945
    %1050 = vmatprep.subr.mxu0 0.0
    %1051 = vmatpush1.msra.mxu0 %v946
    %1052 = vmatprep.subr.mxu0 0.0
    %1053 = vmatpush1.msra.mxu0 %v947
    %1054 = vmatprep.subr.mxu0 0.0
    %1055 = vmatpush1.msra.mxu0 %v948
    %1056 = vmatprep.subr.mxu0 0.0
    %1057 = vmatpush1.msra.mxu0 %v949
    %1058 = vmatprep.subr.mxu0 0.0
    %1059 = vmatpush1.msra.mxu0 %v950
    %1060 = vmatprep.subr.mxu0 0.0
    %1061 = vmatpush1.msra.mxu0 %v951
    %1062 = vmatprep.subr.mxu0 0.0
    %1063 = vmatpush1.msra.mxu0 %v952
    %1064 = vmatprep.subr.mxu0 0.0
    %1065 = vmatpush1.msra.mxu0 0.0
    %1066 = vmatprep.subr.mxu0 0.0
    %1067 = vmatpush1.msra.mxu0 0.0
    %1068 = vmatprep.subr.mxu0 0.0
    %1069 = vmatpush1.msra.mxu0 0.0
    %1070 = vmatprep.subr.mxu0 0.0
    %1071 = vmatpush1.msra.mxu0 0.0
    %1072 = vmatprep.subr.mxu0 0.0
    %1073 = vmatpush1.msra.mxu0 0.0
    %1074 = vmatprep.subr.mxu0 0.0
    %1075 = vmatpush1.msra.mxu0 0.0
    %1076 = vmatprep.subr.mxu0 0.0
    %1077 = vmatpush1.msra.mxu0 0.0
    %1078 = vmatprep.subr.mxu0 0.0
    %1079 = vmatpush1.msra.mxu0 0.0
    %1080 = vmatprep.subr.mxu0 0.0
    %1081 = vmatpush1.msra.mxu0 0.0
    %1082 = vmatprep.subr.mxu0 0.0
    %1083 = vmatpush1.msra.mxu0 0.0
    %1084 = vmatprep.subr.mxu0 0.0
    %1085 = vmatpush1.msra.mxu0 0.0
    %1086 = vmatprep.subr.mxu0 0.0
    %1087 = vmatpush1.msra.mxu0 0.0
    %1088 = vmatprep.subr.mxu0 0.0
    %1089 = vmatpush1.msra.mxu0 0.0
    %1090 = vmatprep.subr.mxu0 0.0
    %1091 = vmatpush1.msra.mxu0 0.0
    %1092 = vmatprep.subr.mxu0 0.0
    %1093 = vmatpush1.msra.mxu0 0.0
    %1094 = vmatprep.subr.mxu0 0.0
    %1095 = vmatpush1.msra.mxu0 0.0
    %1096 = vmatprep.subr.mxu0 0.0
    %1097 = vmatpush1.msra.mxu0 0.0
    %1098 = vmatprep.subr.mxu0 0.0
    %1099 = vmatpush1.msra.mxu0 0.0
    %1100 = vmatprep.subr.mxu0 0.0
    %1101 = vmatpush1.msra.mxu0 0.0
    %1102 = vmatprep.subr.mxu0 0.0
    %1103 = vmatpush1.msra.mxu0 0.0
    %1104 = vmatprep.subr.mxu0 0.0
    %1105 = vmatpush1.msra.mxu0 0.0
    %1106 = vmatprep.subr.mxu0 0.0
    %1107 = vmatpush1.msra.mxu0 0.0
    %1108 = vmatprep.subr.mxu0 0.0
    %1109 = vmatpush1.msra.mxu0 0.0
    %1110 = vmatprep.subr.mxu0 0.0
    %1111 = vmatpush1.msra.mxu0 0.0
    %1112 = vmatprep.mubr.f32.mxu0 0.0
    %1113 = vmatmul.mubr.f32.gmra.mrb[0].mxu0 %v279
    %v1114 = vpop.f32.mrb[0].mxu0
    %v1115 = vadd.f32 0.0, %v1114
    %v1116 = vpop.f32.mrb[0].mxu0
    %1117 = vdwg.mxu0
    %v1118 = vadd.f32 %v1047, %v1115
    %v1119 = vtanh.pop %v1118
    %v1121 = vsel %vm92, %v1119, 0
    %1123 = vmatprep.subr.mxu0 0.0
    %1124 = vmatpush1.msra.mxu0 %v945
    %1125 = vmatprep.subr.mxu0 0.0
    %1126 = vmatpush1.msra.mxu0 %v946
    %1127 = vmatprep.subr.mxu0 0.0
    %1128 = vmatpush1.msra.mxu0 %v947
    %1129 = vmatprep.subr.mxu0 0.0
    %1130 = vmatpush1.msra.mxu0 %v948
    %1131 = vmatprep.subr.mxu0 0.0
    %1132 = vmatpush1.msra.mxu0 %v949
    %1133 = vmatprep.subr.mxu0 0.0
    %1134 = vmatpush1.msra.mxu0 %v950
    %1135 = vmatprep.subr.mxu0 0.0
    %1136 = vmatpush1.msra.mxu0 %v951
    %1137 = vmatprep.subr.mxu0 0.0
    %1138 = vmatpush1.msra.mxu0 %v952
    %1139 = vmatprep.subr.mxu0 0.0
    %1140 = vmatpush1.msra.mxu0 0.0
    %1141 = vmatprep.subr.mxu0 0.0
    %1142 = vmatpush1.msra.mxu0 0.0
    %1143 = vmatprep.subr.mxu0 0.0
    %1144 = vmatpush1.msra.mxu0 0.0
    %1145 = vmatprep.subr.mxu0 0.0
    %1146 = vmatpush1.msra.mxu0 0.0
    %1147 = vmatprep.subr.mxu0 0.0
    %1148 = vmatpush1.msra.mxu0 0.0
    %1149 = vmatprep.subr.mxu0 0.0
    %1150 = vmatpush1.msra.mxu0 0.0
    %1151 = vmatprep.subr.mxu0 0.0
    %1152 = vmatpush1.msra.mxu0 0.0
    %1153 = vmatprep.subr.mxu0 0.0
    %1154 = vmatpush1.msra.mxu0 0.0
    %1155 = vmatprep.subr.mxu0 0.0
    %1156 = vmatpush1.msra.mxu0 0.0
    %1157 = vmatprep.subr.mxu0 0.0
    %1158 = vmatpush1.msra.mxu0 0.0
    %1159 = vmatprep.subr.mxu0 0.0
    %1160 = vmatpush1.msra.mxu0 0.0
    %1161 = vmatprep.subr.mxu0 0.0
    %1162 = vmatpush1.msra.mxu0 0.0
    %1163 = vmatprep.subr.mxu0 0.0
    %1164 = vmatpush1.msra.mxu0 0.0
    %1165 = vmatprep.subr.mxu0 0.0
    %1166 = vmatpush1.msra.mxu0 0.0
    %1167 = vmatprep.subr.mxu0 0.0
    %1168 = vmatpush1.msra.mxu0 0.0
    %1169 = vmatprep.subr.mxu0 0.0
    %1170 = vmatpush1.msra.mxu0 0.0
    %1171 = vmatprep.subr.mxu0 0.0
    %1172 = vmatpush1.msra.mxu0 0.0
    %1173 = vmatprep.subr.mxu0 0.0
    %1174 = vmatpush1.msra.mxu0 0.0
    %1175 = vmatprep.subr.mxu0 0.0
    %1176 = vmatpush1.msra.mxu0 0.0
    %1177 = vmatprep.subr.mxu0 0.0
    %1178 = vmatpush1.msra.mxu0 0.0
    %1179 = vmatprep.subr.mxu0 0.0
    %1180 = vmatpush1.msra.mxu0 0.0
    %1181 = vmatprep.subr.mxu0 0.0
    %1182 = vmatpush1.msra.mxu0 0.0
    %1183 = vmatprep.subr.mxu0 0.0
    %1184 = vmatpush1.msra.mxu0 0.0
    %1185 = vmatprep.subr.mxu0 0.0
    %1186 = vmatpush1.msra.mxu0 0.0
    %1187 = vmatprep.mubr.f32.mxu0 0.0
    %1188 = vmatmul.mubr.f32.gmra.mrb[0].mxu0 %v1121
    %v1189 = vpop.f32.mrb[0].mxu0
    %v1190 = vadd.f32 0.0, %v1189
    %v1191 = vpop.f32.mrb[0].mxu0
    %1192 = vdwg.mxu0
    %v1194 = vrot.slane %v1190, 7
    %v1196 = vadd.f32 %v1047, %v1194
    %v1197 = vtanh.pop %v1196
    %v1199 = vrot.slane %v1197, 1
    %v1200 = vsel %vm92, %v1199, 0
    %1202 = vmatprep.subr.mxu0 0.0
    %1203 = vmatpush1.msra.mxu0 %v945
    %1204 = vmatprep.subr.mxu0 0.0
    %1205 = vmatpush1.msra.mxu0 %v946
    %1206 = vmatprep.subr.mxu0 0.0
    %1207 = vmatpush1.msra.mxu0 %v947
    %1208 = vmatprep.subr.mxu0 0.0
    %1209 = vmatpush1.msra.mxu0 %v948
    %1210 = vmatprep.subr.mxu0 0.0
    %1211 = vmatpush1.msra.mxu0 %v949
    %1212 = vmatprep.subr.mxu0 0.0
    %1213 = vmatpush1.msra.mxu0 %v950
    %1214 = vmatprep.subr.mxu0 0.0
    %1215 = vmatpush1.msra.mxu0 %v951
    %1216 = vmatprep.subr.mxu0 0.0
    %1217 = vmatpush1.msra.mxu0 %v952
    %1218 = vmatprep.subr.mxu0 0.0
    %1219 = vmatpush1.msra.mxu0 0.0
    %1220 = vmatprep.subr.mxu0 0.0
    %1221 = vmatpush1.msra.mxu0 0.0
    %1222 = vmatprep.subr.mxu0 0.0
    %1223 = vmatpush1.msra.mxu0 0.0
    %1224 = vmatprep.subr.mxu0 0.0
    %1225 = vmatpush1.msra.mxu0 0.0
    %1226 = vmatprep.subr.mxu0 0.0
    %1227 = vmatpush1.msra.mxu0 0.0
    %1228 = vmatprep.subr.mxu0 0.0
    %1229 = vmatpush1.msra.mxu0 0.0
    %1230 = vmatprep.subr.mxu0 0.0
    %1231 = vmatpush1.msra.mxu0 0.0
    %1232 = vmatprep.subr.mxu0 0.0
    %1233 = vmatpush1.msra.mxu0 0.0
    %1234 = vmatprep.subr.mxu0 0.0
    %1235 = vmatpush1.msra.mxu0 0.0
    %1236 = vmatprep.subr.mxu0 0.0
    %1237 = vmatpush1.msra.mxu0 0.0
    %1238 = vmatprep.subr.mxu0 0.0
    %1239 = vmatpush1.msra.mxu0 0.0
    %1240 = vmatprep.subr.mxu0 0.0
    %1241 = vmatpush1.msra.mxu0 0.0
    %1242 = vmatprep.subr.mxu0 0.0
    %1243 = vmatpush1.msra.mxu0 0.0
    %1244 = vmatprep.subr.mxu0 0.0
    %1245 = vmatpush1.msra.mxu0 0.0
    %1246 = vmatprep.subr.mxu0 0.0
    %1247 = vmatpush1.msra.mxu0 0.0
    %1248 = vmatprep.subr.mxu0 0.0
    %1249 = vmatpush1.msra.mxu0 0.0
    %1250 = vmatprep.subr.mxu0 0.0
    %1251 = vmatpush1.msra.mxu0 0.0
    %1252 = vmatprep.subr.mxu0 0.0
    %1253 = vmatpush1.msra.mxu0 0.0
    %1254 = vmatprep.subr.mxu0 0.0
    %1255 = vmatpush1.msra.mxu0 0.0
    %1256 = vmatprep.subr.mxu0 0.0
    %1257 = vmatpush1.msra.mxu0 0.0
    %1258 = vmatprep.subr.mxu0 0.0
    %1259 = vmatpush1.msra.mxu0 0.0
    %1260 = vmatprep.subr.mxu0 0.0
    %1261 = vmatpush1.msra.mxu0 0.0
    %1262 = vmatprep.subr.mxu0 0.0
    %1263 = vmatpush1.msra.mxu0 0.0
    %1264 = vmatprep.subr.mxu0 0.0
    %1265 = vmatpush1.msra.mxu0 0.0
    %1266 = vmatprep.mubr.f32.mxu0 0.0
    %1267 = vmatmul.mubr.f32.gmra.mrb[0].mxu0 %v1200
    %v1268 = vpop.f32.mrb[0].mxu0
    %v1269 = vadd.f32 0.0, %v1268
    %v1270 = vpop.f32.mrb[0].mxu0
    %1271 = vdwg.mxu0
    %v1273 = vrot.slane %v1269, 6
    %v1275 = vadd.f32 %v1047, %v1273
    %v1276 = vtanh.pop %v1275
    %v1278 = vrot.slane %v1276, 2
    %v1279 = vsel %vm92, %v1278, 0
    %1281 = vmatprep.subr.mxu0 0.0
    %1282 = vmatpush1.msra.mxu0 %v945
    %1283 = vmatprep.subr.mxu0 0.0
    %1284 = vmatpush1.msra.mxu0 %v946
    %1285 = vmatprep.subr.mxu0 0.0
    %1286 = vmatpush1.msra.mxu0 %v947
    %1287 = vmatprep.subr.mxu0 0.0
    %1288 = vmatpush1.msra.mxu0 %v948
    %1289 = vmatprep.subr.mxu0 0.0
    %1290 = vmatpush1.msra.mxu0 %v949
    %1291 = vmatprep.subr.mxu0 0.0
    %1292 = vmatpush1.msra.mxu0 %v950
    %1293 = vmatprep.subr.mxu0 0.0
    %1294 = vmatpush1.msra.mxu0 %v951
    %1295 = vmatprep.subr.mxu0 0.0
    %1296 = vmatpush1.msra.mxu0 %v952
    %1297 = vmatprep.subr.mxu0 0.0
    %1298 = vmatpush1.msra.mxu0 0.0
    %1299 = vmatprep.subr.mxu0 0.0
    %1300 = vmatpush1.msra.mxu0 0.0
    %1301 = vmatprep.subr.mxu0 0.0
    %1302 = vmatpush1.msra.mxu0 0.0
    %1303 = vmatprep.subr.mxu0 0.0
    %1304 = vmatpush1.msra.mxu0 0.0
    %1305 = vmatprep.subr.mxu0 0.0
    %1306 = vmatpush1.msra.mxu0 0.0
    %1307 = vmatprep.subr.mxu0 0.0
    %1308 = vmatpush1.msra.mxu0 0.0
    %1309 = vmatprep.subr.mxu0 0.0
    %1310 = vmatpush1.msra.mxu0 0.0
    %1311 = vmatprep.subr.mxu0 0.0
    %1312 = vmatpush1.msra.mxu0 0.0
    %1313 = vmatprep.subr.mxu0 0.0
    %1314 = vmatpush1.msra.mxu0 0.0
    %1315 = vmatprep.subr.mxu0 0.0
    %1316 = vmatpush1.msra.mxu0 0.0
    %1317 = vmatprep.subr.mxu0 0.0
    %1318 = vmatpush1.msra.mxu0 0.0
    %1319 = vmatprep.subr.mxu0 0.0
    %1320 = vmatpush1.msra.mxu0 0.0
    %1321 = vmatprep.subr.mxu0 0.0
    %1322 = vmatpush1.msra.mxu0 0.0
    %1323 = vmatprep.subr.mxu0 0.0
    %1324 = vmatpush1.msra.mxu0 0.0
    %1325 = vmatprep.subr.mxu0 0.0
    %1326 = vmatpush1.msra.mxu0 0.0
    %1327 = vmatprep.subr.mxu0 0.0
    %1328 = vmatpush1.msra.mxu0 0.0
    %1329 = vmatprep.subr.mxu0 0.0
    %1330 = vmatpush1.msra.mxu0 0.0
    %1331 = vmatprep.subr.mxu0 0.0
    %1332 = vmatpush1.msra.mxu0 0.0
    %1333 = vmatprep.subr.mxu0 0.0
    %1334 = vmatpush1.msra.mxu0 0.0
    %1335 = vmatprep.subr.mxu0 0.0
    %1336 = vmatpush1.msra.mxu0 0.0
    %1337 = vmatprep.subr.mxu0 0.0
    %1338 = vmatpush1.msra.mxu0 0.0
    %1339 = vmatprep.subr.mxu0 0.0
    %1340 = vmatpush1.msra.mxu0 0.0
    %1341 = vmatprep.subr.mxu0 0.0
    %1342 = vmatpush1.msra.mxu0 0.0
    %1343 = vmatprep.subr.mxu0 0.0
    %1344 = vmatpush1.msra.mxu0 0.0
    %1345 = vmatprep.mubr.f32.mxu0 0.0
    %1346 = vmatmul.mubr.f32.gmra.mrb[0].mxu0 %v1279
    %v1347 = vpop.f32.mrb[0].mxu0
    %v1348 = vadd.f32 0.0, %v1347
    %v1349 = vpop.f32.mrb[0].mxu0
    %1350 = vdwg.mxu0
    %v1352 = vrot.slane %v1348, 5
    %v1354 = vadd.f32 %v1047, %v1352
    %v1355 = vtanh.pop %v1354
    %v1357 = vrot.slane %v1355, 3
    %v1358 = vsel %vm92, %v1357, 0
    %1360 = vmatprep.subr.mxu0 0.0
    %1361 = vmatpush1.msra.mxu0 %v945
    %1362 = vmatprep.subr.mxu0 0.0
    %1363 = vmatpush1.msra.mxu0 %v946
    %1364 = vmatprep.subr.mxu0 0.0
    %1365 = vmatpush1.msra.mxu0 %v947
    %1366 = vmatprep.subr.mxu0 0.0
    %1367 = vmatpush1.msra.mxu0 %v948
    %1368 = vmatprep.subr.mxu0 0.0
    %1369 = vmatpush1.msra.mxu0 %v949
    %1370 = vmatprep.subr.mxu0 0.0
    %1371 = vmatpush1.msra.mxu0 %v950
    %1372 = vmatprep.subr.mxu0 0.0
    %1373 = vmatpush1.msra.mxu0 %v951
    %1374 = vmatprep.subr.mxu0 0.0
    %1375 = vmatpush1.msra.mxu0 %v952
    %1376 = vmatprep.subr.mxu0 0.0
    %1377 = vmatpush1.msra.mxu0 0.0
    %1378 = vmatprep.subr.mxu0 0.0
    %1379 = vmatpush1.msra.mxu0 0.0
    %1380 = vmatprep.subr.mxu0 0.0
    %1381 = vmatpush1.msra.mxu0 0.0
    %1382 = vmatprep.subr.mxu0 0.0
    %1383 = vmatpush1.msra.mxu0 0.0
    %1384 = vmatprep.subr.mxu0 0.0
    %1385 = vmatpush1.msra.mxu0 0.0
    %1386 = vmatprep.subr.mxu0 0.0
    %1387 = vmatpush1.msra.mxu0 0.0
    %1388 = vmatprep.subr.mxu0 0.0
    %1389 = vmatpush1.msra.mxu0 0.0
    %1390 = vmatprep.subr.mxu0 0.0
    %1391 = vmatpush1.msra.mxu0 0.0
    %1392 = vmatprep.subr.mxu0 0.0
    %1393 = vmatpush1.msra.mxu0 0.0
    %1394 = vmatprep.subr.mxu0 0.0
    %1395 = vmatpush1.msra.mxu0 0.0
    %1396 = vmatprep.subr.mxu0 0.0
    %1397 = vmatpush1.msra.mxu0 0.0
    %1398 = vmatprep.subr.mxu0 0.0
    %1399 = vmatpush1.msra.mxu0 0.0
    %1400 = vmatprep.subr.mxu0 0.0
    %1401 = vmatpush1.msra.mxu0 0.0
    %1402 = vmatprep.subr.mxu0 0.0
    %1403 = vmatpush1.msra.mxu0 0.0
    %1404 = vmatprep.subr.mxu0 0.0
    %1405 = vmatpush1.msra.mxu0 0.0
    %1406 = vmatprep.subr.mxu0 0.0
    %1407 = vmatpush1.msra.mxu0 0.0
    %1408 = vmatprep.subr.mxu0 0.0
    %1409 = vmatpush1.msra.mxu0 0.0
    %1410 = vmatprep.subr.mxu0 0.0
    %1411 = vmatpush1.msra.mxu0 0.0
    %1412 = vmatprep.subr.mxu0 0.0
    %1413 = vmatpush1.msra.mxu0 0.0
    %1414 = vmatprep.subr.mxu0 0.0
    %1415 = vmatpush1.msra.mxu0 0.0
    %1416 = vmatprep.subr.mxu0 0.0
    %1417 = vmatpush1.msra.mxu0 0.0
    %1418 = vmatprep.subr.mxu0 0.0
    %1419 = vmatpush1.msra.mxu0 0.0
    %1420 = vmatprep.subr.mxu0 0.0
    %1421 = vmatpush1.msra.mxu0 0.0
    %1422 = vmatprep.subr.mxu0 0.0
    %1423 = vmatpush1.msra.mxu0 0.0
    %1424 = vmatprep.mubr.f32.mxu0 0.0
    %1425 = vmatmul.mubr.f32.gmra.mrb[0].mxu0 %v1358
    %v1426 = vpop.f32.mrb[0].mxu0
    %v1427 = vadd.f32 0.0, %v1426
    %v1428 = vpop.f32.mrb[0].mxu0
    %1429 = vdwg.mxu0
    %v1431 = vrot.slane %v1427, 4
    %v1433 = vadd.f32 %v1047, %v1431
    %v1434 = vtanh.pop %v1433
    %v1436 = vrot.slane %v1434, 4
    %v1437 = vsel %vm92, %v1436, 0
    %1439 = vmatprep.subr.mxu0 0.0
    %1440 = vmatpush1.msra.mxu0 %v945
    %1441 = vmatprep.subr.mxu0 0.0
    %1442 = vmatpush1.msra.mxu0 %v946
    %1443 = vmatprep.subr.mxu0 0.0
    %1444 = vmatpush1.msra.mxu0 %v947
    %1445 = vmatprep.subr.mxu0 0.0
    %1446 = vmatpush1.msra.mxu0 %v948
    %1447 = vmatprep.subr.mxu0 0.0
    %1448 = vmatpush1.msra.mxu0 %v949
    %1449 = vmatprep.subr.mxu0 0.0
    %1450 = vmatpush1.msra.mxu0 %v950
    %1451 = vmatprep.subr.mxu0 0.0
    %1452 = vmatpush1.msra.mxu0 %v951
    %1453 = vmatprep.subr.mxu0 0.0
    %1454 = vmatpush1.msra.mxu0 %v952
    %1455 = vmatprep.subr.mxu0 0.0
    %1456 = vmatpush1.msra.mxu0 0.0
    %1457 = vmatprep.subr.mxu0 0.0
    %1458 = vmatpush1.msra.mxu0 0.0
    %1459 = vmatprep.subr.mxu0 0.0
    %1460 = vmatpush1.msra.mxu0 0.0
    %1461 = vmatprep.subr.mxu0 0.0
    %1462 = vmatpush1.msra.mxu0 0.0
    %1463 = vmatprep.subr.mxu0 0.0
    %1464 = vmatpush1.msra.mxu0 0.0
    %1465 = vmatprep.subr.mxu0 0.0
    %1466 = vmatpush1.msra.mxu0 0.0
    %1467 = vmatprep.subr.mxu0 0.0
    %1468 = vmatpush1.msra.mxu0 0.0
    %1469 = vmatprep.subr.mxu0 0.0
    %1470 = vmatpush1.msra.mxu0 0.0
    %1471 = vmatprep.subr.mxu0 0.0
    %1472 = vmatpush1.msra.mxu0 0.0
    %1473 = vmatprep.subr.mxu0 0.0
    %1474 = vmatpush1.msra.mxu0 0.0
    %1475 = vmatprep.subr.mxu0 0.0
    %1476 = vmatpush1.msra.mxu0 0.0
    %1477 = vmatprep.subr.mxu0 0.0
    %1478 = vmatpush1.msra.mxu0 0.0
    %1479 = vmatprep.subr.mxu0 0.0
    %1480 = vmatpush1.msra.mxu0 0.0
    %1481 = vmatprep.subr.mxu0 0.0
    %1482 = vmatpush1.msra.mxu0 0.0
    %1483 = vmatprep.subr.mxu0 0.0
    %1484 = vmatpush1.msra.mxu0 0.0
    %1485 = vmatprep.subr.mxu0 0.0
    %1486 = vmatpush1.msra.mxu0 0.0
    %1487 = vmatprep.subr.mxu0 0.0
    %1488 = vmatpush1.msra.mxu0 0.0
    %1489 = vmatprep.subr.mxu0 0.0
    %1490 = vmatpush1.msra.mxu0 0.0
    %1491 = vmatprep.subr.mxu0 0.0
    %1492 = vmatpush1.msra.mxu0 0.0
    %1493 = vmatprep.subr.mxu0 0.0
    %1494 = vmatpush1.msra.mxu0 0.0
    %1495 = vmatprep.subr.mxu0 0.0
    %1496 = vmatpush1.msra.mxu0 0.0
    %1497 = vmatprep.subr.mxu0 0.0
    %1498 = vmatpush1.msra.mxu0 0.0
    %1499 = vmatprep.subr.mxu0 0.0
    %1500 = vmatpush1.msra.mxu0 0.0
    %1501 = vmatprep.subr.mxu0 0.0
    %1502 = vmatpush1.msra.mxu0 0.0
    %1503 = vmatprep.mubr.f32.mxu0 0.0
    %1504 = vmatmul.mubr.f32.gmra.mrb[0].mxu0 %v1437
    %v1505 = vpop.f32.mrb[0].mxu0
    %v1506 = vadd.f32 0.0, %v1505
    %v1507 = vpop.f32.mrb[0].mxu0
    %1508 = vdwg.mxu0
    %v1510 = vrot.slane %v1506, 3
    %v1512 = vadd.f32 %v1047, %v1510
    %v1513 = vtanh.pop %v1512
    %v1515 = vrot.slane %v1513, 5
    %v1516 = vsel %vm92, %v1515, 0
    %1518 = vmatprep.subr.mxu0 0.0
    %1519 = vmatpush1.msra.mxu0 %v945
    %1520 = vmatprep.subr.mxu0 0.0
    %1521 = vmatpush1.msra.mxu0 %v946
    %1522 = vmatprep.subr.mxu0 0.0
    %1523 = vmatpush1.msra.mxu0 %v947
    %1524 = vmatprep.subr.mxu0 0.0
    %1525 = vmatpush1.msra.mxu0 %v948
    %1526 = vmatprep.subr.mxu0 0.0
    %1527 = vmatpush1.msra.mxu0 %v949
    %1528 = vmatprep.subr.mxu0 0.0
    %1529 = vmatpush1.msra.mxu0 %v950
    %1530 = vmatprep.subr.mxu0 0.0
    %1531 = vmatpush1.msra.mxu0 %v951
    %1532 = vmatprep.subr.mxu0 0.0
    %1533 = vmatpush1.msra.mxu0 %v952
    %1534 = vmatprep.subr.mxu0 0.0
    %1535 = vmatpush1.msra.mxu0 0.0
    %1536 = vmatprep.subr.mxu0 0.0
    %1537 = vmatpush1.msra.mxu0 0.0
    %1538 = vmatprep.subr.mxu0 0.0
    %1539 = vmatpush1.msra.mxu0 0.0
    %1540 = vmatprep.subr.mxu0 0.0
    %1541 = vmatpush1.msra.mxu0 0.0
    %1542 = vmatprep.subr.mxu0 0.0
    %1543 = vmatpush1.msra.mxu0 0.0
    %1544 = vmatprep.subr.mxu0 0.0
    %1545 = vmatpush1.msra.mxu0 0.0
    %1546 = vmatprep.subr.mxu0 0.0
    %1547 = vmatpush1.msra.mxu0 0.0
    %1548 = vmatprep.subr.mxu0 0.0
    %1549 = vmatpush1.msra.mxu0 0.0
    %1550 = vmatprep.subr.mxu0 0.0
    %1551 = vmatpush1.msra.mxu0 0.0
    %1552 = vmatprep.subr.mxu0 0.0
    %1553 = vmatpush1.msra.mxu0 0.0
    %1554 = vmatprep.subr.mxu0 0.0
    %1555 = vmatpush1.msra.mxu0 0.0
    %1556 = vmatprep.subr.mxu0 0.0
    %1557 = vmatpush1.msra.mxu0 0.0
    %1558 = vmatprep.subr.mxu0 0.0
    %1559 = vmatpush1.msra.mxu0 0.0
    %1560 = vmatprep.subr.mxu0 0.0
    %1561 = vmatpush1.msra.mxu0 0.0
    %1562 = vmatprep.subr.mxu0 0.0
    %1563 = vmatpush1.msra.mxu0 0.0
    %1564 = vmatprep.subr.mxu0 0.0
    %1565 = vmatpush1.msra.mxu0 0.0
    %1566 = vmatprep.subr.mxu0 0.0
    %1567 = vmatpush1.msra.mxu0 0.0
    %1568 = vmatprep.subr.mxu0 0.0
    %1569 = vmatpush1.msra.mxu0 0.0
    %1570 = vmatprep.subr.mxu0 0.0
    %1571 = vmatpush1.msra.mxu0 0.0
    %1572 = vmatprep.subr.mxu0 0.0
    %1573 = vmatpush1.msra.mxu0 0.0
    %1574 = vmatprep.subr.mxu0 0.0
    %1575 = vmatpush1.msra.mxu0 0.0
    %1576 = vmatprep.subr.mxu0 0.0
    %1577 = vmatpush1.msra.mxu0 0.0
    %1578 = vmatprep.subr.mxu0 0.0
    %1579 = vmatpush1.msra.mxu0 0.0
    %1580 = vmatprep.subr.mxu0 0.0
    %1581 = vmatpush1.msra.mxu0 0.0
    %1582 = vmatprep.mubr.f32.mxu0 0.0
    %1583 = vmatmul.mubr.f32.gmra.mrb[0].mxu0 %v1516
    %v1584 = vpop.f32.mrb[0].mxu0
    %v1585 = vadd.f32 0.0, %v1584
    %v1586 = vpop.f32.mrb[0].mxu0
    %1587 = vdwg.mxu0
    %v1589 = vrot.slane %v1585, 2
    %v1591 = vadd.f32 %v1047, %v1589
    %v1592 = vtanh.pop %v1591
    %v1594 = vrot.slane %v1592, 6
    %v1595 = vsel %vm92, %v1594, 0
    %1597 = vmatprep.subr.mxu0 0.0
    %1598 = vmatpush1.msra.mxu0 %v945
    %1599 = vmatprep.subr.mxu0 0.0
    %1600 = vmatpush1.msra.mxu0 %v946
    %1601 = vmatprep.subr.mxu0 0.0
    %1602 = vmatpush1.msra.mxu0 %v947
    %1603 = vmatprep.subr.mxu0 0.0
    %1604 = vmatpush1.msra.mxu0 %v948
    %1605 = vmatprep.subr.mxu0 0.0
    %1606 = vmatpush1.msra.mxu0 %v949
    %1607 = vmatprep.subr.mxu0 0.0
    %1608 = vmatpush1.msra.mxu0 %v950
    %1609 = vmatprep.subr.mxu0 0.0
    %1610 = vmatpush1.msra.mxu0 %v951
    %1611 = vmatprep.subr.mxu0 0.0
    %1612 = vmatpush1.msra.mxu0 %v952
    %1613 = vmatprep.subr.mxu0 0.0
    %1614 = vmatpush1.msra.mxu0 0.0
    %1615 = vmatprep.subr.mxu0 0.0
    %1616 = vmatpush1.msra.mxu0 0.0
    %1617 = vmatprep.subr.mxu0 0.0
    %1618 = vmatpush1.msra.mxu0 0.0
    %1619 = vmatprep.subr.mxu0 0.0
    %1620 = vmatpush1.msra.mxu0 0.0
    %1621 = vmatprep.subr.mxu0 0.0
    %1622 = vmatpush1.msra.mxu0 0.0
    %1623 = vmatprep.subr.mxu0 0.0
    %1624 = vmatpush1.msra.mxu0 0.0
    %1625 = vmatprep.subr.mxu0 0.0
    %1626 = vmatpush1.msra.mxu0 0.0
    %1627 = vmatprep.subr.mxu0 0.0
    %1628 = vmatpush1.msra.mxu0 0.0
    %1629 = vmatprep.subr.mxu0 0.0
    %1630 = vmatpush1.msra.mxu0 0.0
    %1631 = vmatprep.subr.mxu0 0.0
    %1632 = vmatpush1.msra.mxu0 0.0
    %1633 = vmatprep.subr.mxu0 0.0
    %1634 = vmatpush1.msra.mxu0 0.0
    %1635 = vmatprep.subr.mxu0 0.0
    %1636 = vmatpush1.msra.mxu0 0.0
    %1637 = vmatprep.subr.mxu0 0.0
    %1638 = vmatpush1.msra.mxu0 0.0
    %1639 = vmatprep.subr.mxu0 0.0
    %1640 = vmatpush1.msra.mxu0 0.0
    %1641 = vmatprep.subr.mxu0 0.0
    %1642 = vmatpush1.msra.mxu0 0.0
    %1643 = vmatprep.subr.mxu0 0.0
    %1644 = vmatpush1.msra.mxu0 0.0
    %1645 = vmatprep.subr.mxu0 0.0
    %1646 = vmatpush1.msra.mxu0 0.0
    %1647 = vmatprep.subr.mxu0 0.0
    %1648 = vmatpush1.msra.mxu0 0.0
    %1649 = vmatprep.subr.mxu0 0.0
    %1650 = vmatpush1.msra.mxu0 0.0
    %1651 = vmatprep.subr.mxu0 0.0
    %1652 = vmatpush1.msra.mxu0 0.0
    %1653 = vmatprep.subr.mxu0 0.0
    %1654 = vmatpush1.msra.mxu0 0.0
    %1655 = vmatprep.subr.mxu0 0.0
    %1656 = vmatpush1.msra.mxu0 0.0
    %1657 = vmatprep.subr.mxu0 0.0
    %1658 = vmatpush1.msra.mxu0 0.0
    %1659 = vmatprep.subr.mxu0 0.0
    %1660 = vmatpush1.msra.mxu0 0.0
    %1661 = vmatprep.mubr.f32.mxu0 0.0
    %1662 = vmatmul.mubr.f32.gmra.mrb[0].mxu0 %v1595
    %v1663 = vpop.f32.mrb[0].mxu0
    %v1664 = vadd.f32 0.0, %v1663
    %v1665 = vpop.f32.mrb[0].mxu0
    %1666 = vdwg.mxu0
    %v1668 = vrot.slane %v1664, 1
    %v1670 = vadd.f32 %v1047, %v1668
    %v1671 = vtanh.pop %v1670
    %v1672 = vsel %vm70, %v1119, %v1197
    %v1673 = vsel %vm72, %v1672, %v1276
    %v1674 = vsel %vm74, %v1673, %v1355
    %v1675 = vsel %vm76, %v1674, %v1434
    %v1676 = vsel %vm78, %v1675, %v1513
    %v1677 = vsel %vm80, %v1676, %v1592
    %v1678 = vsel %vm82, %v1677, %v1671
    %v1680 = vrot.slane %v1671, 7
    %v1682 = vrot.slane %v1592, 5
    %v1684 = vrot.slane %v1513, 3
    %v1686 = vrot.slane %v1434, 1
    %v1688 = vrot.slane %v1355, 7
    %v1690 = vrot.slane %v1276, 5
    %v1692 = vrot.slane %v1197, 3
    %v1694 = vrot.slane %v1119, 1
    %v1696 = vsel %vm70, %v1680, %v1682
    %v1697 = vsel %vm72, %v1696, %v1684
    %v1698 = vsel %vm74, %v1697, %v1686
    %v1699 = vsel %vm76, %v1698, %v1688
    %v1700 = vsel %vm78, %v1699, %v1690
    %v1701 = vsel %vm80, %v1700, %v1692
    %v1702 = vsel %vm82, %v1701, %v1694
    %v1703 = vsel %vm276, %v1678, %v1702
    %v1704 = vld [vmem:[#allocation4 + $0x148] sm:$0xff]
    %v1705 = vld [vmem:[#allocation4 + $0x150] sm:$0xff]
    %v1706 = vld [vmem:[#allocation4 + $0x158] sm:$0xff]
    %v1707 = vld [vmem:[#allocation4 + $0x160] sm:$0xff]
    %v1708 = vld [vmem:[#allocation4 + $0x168] sm:$0xff]
    %v1709 = vld [vmem:[#allocation4 + $0x170] sm:$0xff]
    %v1710 = vld [vmem:[#allocation4 + $0x178] sm:$0xff]
    %v1711 = vld [vmem:[#allocation4 + $0x180] sm:$0xff]
    %v1712 = vld [vmem:[#allocation4 + $0x188] sm:$0x1]
    %v1713 = vlaneseq
    %v1714 = vshrl.u32 %v1713, 7
    %v1715 = vsub.s32 0, %v1714
    %v1716 = vrot.slane %v1712, %v1715
    %v1718 = vsel %vm92, %v1703, 0
    %1720 = vmatprep.subr.mxu0 0.0
    %1721 = vmatpush1.msra.mxu0 %v1704
    %1722 = vmatprep.subr.mxu0 0.0
    %1723 = vmatpush1.msra.mxu0 %v1705
    %1724 = vmatprep.subr.mxu0 0.0
    %1725 = vmatpush1.msra.mxu0 %v1706
    %1726 = vmatprep.subr.mxu0 0.0
    %1727 = vmatpush1.msra.mxu0 %v1707
    %1728 = vmatprep.subr.mxu0 0.0
    %1729 = vmatpush1.msra.mxu0 %v1708
    %1730 = vmatprep.subr.mxu0 0.0
    %1731 = vmatpush1.msra.mxu0 %v1709
    %1732 = vmatprep.subr.mxu0 0.0
    %1733 = vmatpush1.msra.mxu0 %v1710
    %1734 = vmatprep.subr.mxu0 0.0
    %1735 = vmatpush1.msra.mxu0 %v1711
    %1736 = vmatprep.subr.mxu0 0.0
    %1737 = vmatpush1.msra.mxu0 0.0
    %1738 = vmatprep.subr.mxu0 0.0
    %1739 = vmatpush1.msra.mxu0 0.0
    %1740 = vmatprep.subr.mxu0 0.0
    %1741 = vmatpush1.msra.mxu0 0.0
    %1742 = vmatprep.subr.mxu0 0.0
    %1743 = vmatpush1.msra.mxu0 0.0
    %1744 = vmatprep.subr.mxu0 0.0
    %1745 = vmatpush1.msra.mxu0 0.0
    %1746 = vmatprep.subr.mxu0 0.0
    %1747 = vmatpush1.msra.mxu0 0.0
    %1748 = vmatprep.subr.mxu0 0.0
    %1749 = vmatpush1.msra.mxu0 0.0
    %1750 = vmatprep.subr.mxu0 0.0
    %1751 = vmatpush1.msra.mxu0 0.0
    %1752 = vmatprep.subr.mxu0 0.0
    %1753 = vmatpush1.msra.mxu0 0.0
    %1754 = vmatprep.subr.mxu0 0.0
    %1755 = vmatpush1.msra.mxu0 0.0
    %1756 = vmatprep.subr.mxu0 0.0
    %1757 = vmatpush1.msra.mxu0 0.0
    %1758 = vmatprep.subr.mxu0 0.0
    %1759 = vmatpush1.msra.mxu0 0.0
    %1760 = vmatprep.subr.mxu0 0.0
    %1761 = vmatpush1.msra.mxu0 0.0
    %1762 = vmatprep.subr.mxu0 0.0
    %1763 = vmatpush1.msra.mxu0 0.0
    %1764 = vmatprep.subr.mxu0 0.0
    %1765 = vmatpush1.msra.mxu0 0.0
    %1766 = vmatprep.subr.mxu0 0.0
    %1767 = vmatpush1.msra.mxu0 0.0
    %1768 = vmatprep.subr.mxu0 0.0
    %1769 = vmatpush1.msra.mxu0 0.0
    %1770 = vmatprep.subr.mxu0 0.0
    %1771 = vmatpush1.msra.mxu0 0.0
    %1772 = vmatprep.subr.mxu0 0.0
    %1773 = vmatpush1.msra.mxu0 0.0
    %1774 = vmatprep.subr.mxu0 0.0
    %1775 = vmatpush1.msra.mxu0 0.0
    %1776 = vmatprep.subr.mxu0 0.0
    %1777 = vmatpush1.msra.mxu0 0.0
    %1778 = vmatprep.subr.mxu0 0.0
    %1779 = vmatpush1.msra.mxu0 0.0
    %1780 = vmatprep.subr.mxu0 0.0
    %1781 = vmatpush1.msra.mxu0 0.0
    %1782 = vmatprep.subr.mxu0 0.0
    %1783 = vmatpush1.msra.mxu0 0.0
    %1784 = vmatprep.mubr.f32.mxu0 0.0
    %1785 = vmatmul.mubr.f32.gmra.mrb[0].mxu0 %v1718
    %v1786 = vpop.f32.mrb[0].mxu0
    %v1787 = vadd.f32 %v1716, %v1786
    %v1788 = vpop.f32.mrb[0].mxu0
    %1789 = vdwg.mxu0
    %1790 = vmax.xlane.f32.xlu0 %v1787
    %v1791 = vpop.xlane.xlu0 %1790
    %v1792 = vsub.f32 %v1787, %v1791
    %v1793 = vmul.f32 %v1792, 1.442695
    %v1794 = vpow.pop %v1793
    %1795 = vadd.xlane.f32.xlu0 %v1794
    %v1796 = vpop.xlane.xlu0 %1795
    %v1797 = vlog2.pop %v1796
    %v1798 = vmul.f32 %v1797, 0.6931472
    %v1799 = vsub.f32 %v1792, %v1798
    %1800 = vst [vmem:[#allocation7] sm:$0xff] %v1799
    // Predicated region
    $region10: #{tpu_custom_call.1} parent=1 // pred_check
      _
    $region11: #{tpu_custom_call.1} parent=1 // pred_check_branch
      %1802 = sbr.rel (0) target = $region13
    $region12: #{tpu_custom_call.1} parent=1 // pred_region
      %s1804 = ssub.s32 128, 128
      %1805 = vsyncadd [#allocation6], %s1804
      %s1807 = sshll.u32 [#allocation7], 4
      %s1808 = int_to_ptr.vmem [resolvable:$true] %s1807
      %1810 = dma.vmem_to_hbm [thread:$0]  %s1808, 128, %s2, [#allocation6]
    $region13: #{tpu_custom_call.1} parent=1 // pred_fallthru
      _
    // Predicated region
    $region14: #{tpu_custom_call.1} parent=1 // pred_check
      _
    $region15: #{tpu_custom_call.1} parent=1 // pred_check_branch
      %1812 = sbr.rel (0) target = $region17
    $region16: #{tpu_custom_call.1} parent=1 // pred_region
      %1813 = dma.done [#allocation6], 128
    $region17: #{tpu_custom_call.1} parent=1 // pred_fallthru
      _
    %1814 = vsyncpa [#allocation5], 1
    %1815 = vsyncpa [#allocation6], 1

</llo_original>
